<compile_context>
chip_gen: v7x
topology: tpu7x:2x2x1
jax: 0.10.0
libtpu: 0.0.40
codegen_flags: <defaults>
</compile_context>

<pallas_src>
import functools

import jax
import jax.numpy as jnp
from jax.experimental import pallas as pl
from jax.experimental.pallas import tpu as pltpu

# ----------------------------- model config (small, synthetic) ---------------
BATCH = 2
SEQ = 8
HIDDEN = 32
NUM_HEADS = 2
FFN = 64
NUM_LAYERS = 2
VOCAB = 64
MAX_POS = 16
LN_EPS = 1e-12


# ----------------------------- in-kernel math helpers -------------------------
def _layernorm(x, g, b, eps=LN_EPS):
    mu = jnp.mean(x, axis=-1, keepdims=True)
    var = jnp.mean((x - mu) ** 2, axis=-1, keepdims=True)
    return (x - mu) * jax.lax.rsqrt(var + eps) * g + b


def _gelu(x):
    # TODO(synk): HF BERT/DPR default is exact (erf) GELU; tanh approx differs ~1e-3.
    return 0.5 * x * (1.0 + jnp.tanh(0.7978845608028654 * (x + 0.044715 * x * x * x)))


# ----------------------------- fused encoder-stack kernel ---------------------
def encoder_stack_kernel(num_heads,
                         emb_ref, mask_ref, embg_ref, embb_ref,
                         wqkv_ref, bqkv_ref, wo_ref, bo_ref,
                         ln1g_ref, ln1b_ref,
                         wi_ref, bi_ref, wf_ref, bf_ref,
                         ln2g_ref, ln2b_ref,
                         o_ref,
                         x_sc, bias_sc):
    layer = pl.program_id(1)
    n_layers = pl.num_programs(1)
    B, S = mask_ref.shape
    H = x_sc.shape[-1]
    dh = H // num_heads
    scale = 1.0 / float(dh) ** 0.5

    @pl.when(layer == 0)
    def _():
        # Embedding LayerNorm folded into the fused kernel; additive pad-mask
        # bias computed once per encoder and kept resident in VMEM scratch.
        x_sc[...] = _layernorm(emb_ref[...], embg_ref[...], embb_ref[...])
        bias_sc[...] = (1.0 - mask_ref[...]) * (-1e9)

    x = x_sc[...]                                     # (B*S, H) f32, VMEM-resident
    xb = x.astype(jnp.bfloat16)

    # Fused QKV projection: one (B*S, H) x (H, 3H) MXU dot, bf16 in / f32 acc.
    qkv = jnp.dot(xb, wqkv_ref[...], preferred_element_type=jnp.float32)
    qkv = qkv + bqkv_ref[...]                         # (B*S, 3H) f32
    bias3 = bias_sc[...][:, None, :]                  # (B, 1, S), hoisted out of head loop

    # Per-head attention (softmax in f32); heads concatenated afterwards so the
    # output projection is a single dot with the full Wo.  num_heads is a
    # static Python int -> loop fully unrolled for the LLO scheduler.
    ctx_heads = []
    for h in range(num_heads):
        lo = h * dh
        qh = qkv[:, lo:lo + dh].reshape(B, S, dh)
        kh = qkv[:, H + lo:H + lo + dh].reshape(B, S, dh)
        vh = qkv[:, 2 * H + lo:2 * H + lo + dh].reshape(B, S, dh)
        scores = jnp.einsum('bqd,bkd->bqk', qh, kh,
                            preferred_element_type=jnp.float32) * scale + bias3
        m = jnp.max(scores, axis=-1, keepdims=True)
        p = jnp.exp(scores - m)
        p = p * pl.reciprocal(jnp.sum(p, axis=-1, keepdims=True), approx=True)
        ctx_heads.append(jnp.einsum('bqk,bkd->bqd', p, vh,
                                    preferred_element_type=jnp.float32))
    ctx = jnp.concatenate(ctx_heads, axis=-1).reshape(B * S, H)

    attn = jnp.dot(ctx.astype(jnp.bfloat16), wo_ref[...],
                   preferred_element_type=jnp.float32) + bo_ref[...]
    h1 = _layernorm(x + attn, ln1g_ref[...], ln1b_ref[...])

    ff = _gelu(jnp.dot(h1.astype(jnp.bfloat16), wi_ref[...],
                       preferred_element_type=jnp.float32) + bi_ref[...])
    ff = jnp.dot(ff.astype(jnp.bfloat16), wf_ref[...],
                 preferred_element_type=jnp.float32) + bf_ref[...]
    x_new = _layernorm(h1 + ff, ln2g_ref[...], ln2b_ref[...])
    x_sc[...] = x_new

    @pl.when(layer == n_layers - 1)
    def _():
        # DPR pooler_output == CLS hidden state: select rows {0, S, 2S, ...}
        # via a tiny one-hot matmul (lowering-safe, MXU-cheap, lane-dense store).
        cols = jax.lax.broadcasted_iota(jnp.int32, (B, B * S), 1)
        want = jax.lax.broadcasted_iota(jnp.int32, (B, B * S), 0) * S
        sel = (cols == want).astype(jnp.float32)
        o_ref[...] = jnp.dot(sel, x_new, preferred_element_type=jnp.float32)


# ----------------------------- Pallas wrapper ----------------------------------
def dpr_encoders_fused(stacked, emb, mask):
    """Run question+context encoders in one pallas_call.

    emb:  (2, B*S, H) f32 pre-LN embeddings (word+pos+type).
    mask: (2, B, S) f32 attention masks (1 = keep, 0 = pad).
    stacked: params with leading (2,) or (2, L, ...) axes (matmul weights in bf16).
    Returns (2, B, H) CLS hidden states.
    """
    E, R, H = emb.shape
    _, B, S = mask.shape
    L = stacked['wqkv'].shape[1]
    F = stacked['wi'].shape[-1]

    def enc_spec(shape):   # constant across layers, varies per encoder
        return pl.BlockSpec((None,) + shape, lambda e, l: (e,) + (0,) * len(shape))

    def lay_spec(shape):   # per-(encoder, layer) weight slab, pipelined over l
        return pl.BlockSpec((None, None) + shape,
                            lambda e, l: (e, l) + (0,) * len(shape))

    in_specs = [
        enc_spec((R, H)),        # emb
        enc_spec((B, S)),        # mask
        enc_spec((1, H)),        # emb_ln_g
        enc_spec((1, H)),        # emb_ln_b
        lay_spec((H, 3 * H)),    # wqkv
        lay_spec((1, 3 * H)),    # bqkv
        lay_spec((H, H)),        # wo
        lay_spec((1, H)),        # bo
        lay_spec((1, H)),        # ln1_g
        lay_spec((1, H)),        # ln1_b
        lay_spec((H, F)),        # wi
        lay_spec((1, F)),        # bi
        lay_spec((F, H)),        # wf
        lay_spec((1, H)),        # bf
        lay_spec((1, H)),        # ln2_g
        lay_spec((1, H)),        # ln2_b
    ]
    args = (emb, mask, stacked['emb_ln_g'], stacked['emb_ln_b'],
            stacked['wqkv'], stacked['bqkv'], stacked['wo'], stacked['bo'],
            stacked['ln1_g'], stacked['ln1_b'], stacked['wi'], stacked['bi'],
            stacked['wf'], stacked['bf'], stacked['ln2_g'], stacked['ln2_b'])

    return pl.pallas_call(
        functools.partial(encoder_stack_kernel, NUM_HEADS),
        out_shape=jax.ShapeDtypeStruct((E, B, H), jnp.float32),
        grid_spec=pltpu.PrefetchScalarGridSpec(
            num_scalar_prefetch=0,
            grid=(E, L),
            in_specs=in_specs,
            out_specs=pl.BlockSpec((None, B, H), lambda e, l: (e, 0, 0)),
            scratch_shapes=[pltpu.VMEM((R, H), jnp.float32),   # resident activation
                            pltpu.VMEM((B, S), jnp.float32)],  # pad-mask bias
        ),
        compiler_params=pltpu.CompilerParams(
            dimension_semantics=("parallel", "arbitrary")),
    )(*args)


# ----------------------------- forward (glue in plain JAX) ---------------------
def _compute_embeddings(params, input_ids):
    B, S = input_ids.shape
    emb = (params['word_emb'][input_ids]
           + params['pos_emb'][:S][None, :, :]
           + params['type_emb'][0][None, None, :])
    return emb.reshape(B * S, HIDDEN).astype(jnp.float32)


_STACK_KEYS = ('emb_ln_g', 'emb_ln_b', 'wqkv', 'bqkv', 'wo', 'bo', 'ln1_g',
               'ln1_b', 'wi', 'bi', 'wf', 'bf', 'ln2_g', 'ln2_b')
_BF16_KEYS = ('wqkv', 'wo', 'wi', 'wf')


def prepare_stacked_params(q_params, c_params):
    """One-time prep (outside jit): stack question/context encoder params along
    a leading 'encoder' axis and cast matmul weights to bf16 for the MXU, so the
    per-call jitted forward does no stacking/casting work."""
    return {k: jnp.stack([q_params[k], c_params[k]]).astype(
                 jnp.bfloat16 if k in _BF16_KEYS else jnp.float32)
            for k in _STACK_KEYS}


def dpr_combined_forward(q_params, c_params, stacked,
                         question_input_ids, question_attention_mask,
                         context_input_ids, context_attention_mask):
    # Embedding gathers (glue, plain JAX). Dropout is identity in eval mode.
    q_emb = _compute_embeddings(q_params, question_input_ids)
    c_emb = _compute_embeddings(c_params, context_input_ids)
    emb = jnp.stack([q_emb, c_emb])                                   # (2, B*S, H)
    mask = jnp.stack([question_attention_mask,
                      context_attention_mask]).astype(jnp.float32)    # (2, B, S)

    # Both encoders run in ONE pallas_call (parallel encoder grid axis).
    # NOTE: requires question/context inputs to share (B, S), as they do here.
    out = dpr_encoders_fused(stacked, emb, mask)                      # (2, B, H)
    return out[0], out[1]


# ----------------------------- deterministic parameter init -------------------
def _normal(key, shape, std=0.02):
    return std * jax.random.normal(key, shape, jnp.float32)


def init_encoder_params(key, vocab, max_pos, hidden, ffn, num_layers):
    k_emb, k_layers = jax.random.split(key)
    eks = jax.random.split(k_emb, 3)
    lks = jax.random.split(k_layers, num_layers)

    def layer(k):
        w = jax.random.split(k, 6)
        return dict(
            wqkv=jnp.concatenate([_normal(w[0], (hidden, hidden)),
                                  _normal(w[1], (hidden, hidden)),
                                  _normal(w[2], (hidden, hidden))], axis=-1),
            bqkv=jnp.zeros((1, 3 * hidden), jnp.float32),
            wo=_normal(w[3], (hidden, hidden)),
            bo=jnp.zeros((1, hidden), jnp.float32),
            ln1_g=jnp.ones((1, hidden), jnp.float32),
            ln1_b=jnp.zeros((1, hidden), jnp.float32),
            wi=_normal(w[4], (hidden, ffn)),
            bi=jnp.zeros((1, ffn), jnp.float32),
            wf=_normal(w[5], (ffn, hidden)),
            bf=jnp.zeros((1, hidden), jnp.float32),
            ln2_g=jnp.ones((1, hidden), jnp.float32),
            ln2_b=jnp.zeros((1, hidden), jnp.float32),
        )

    layers = [layer(k) for k in lks]
    stacked_layers = jax.tree_util.tree_map(lambda *xs: jnp.stack(xs), *layers)
    return dict(
        word_emb=_normal(eks[0], (vocab, hidden)),
        pos_emb=_normal(eks[1], (max_pos, hidden)),
        type_emb=_normal(eks[2], (2, hidden)),
        emb_ln_g=jnp.ones((1, hidden), jnp.float32),
        emb_ln_b=jnp.zeros((1, hidden), jnp.float32),
        **stacked_layers,     # each per-layer tensor has leading (L, ...) axis
    )


# ----------------------------- main --------------------------------------------
if __name__ == "__main__":
    root = jax.random.PRNGKey(0)
    k_qenc, k_cenc, k_qids, k_cids = jax.random.split(root, 4)

    q_params = init_encoder_params(k_qenc, VOCAB, MAX_POS, HIDDEN, FFN, NUM_LAYERS)
    c_params = init_encoder_params(k_cenc, VOCAB, MAX_POS, HIDDEN, FFN, NUM_LAYERS)
    stacked = prepare_stacked_params(q_params, c_params)   # one-time, outside jit

    question_input_ids = jax.random.randint(k_qids, (BATCH, SEQ), 0, VOCAB, jnp.int32)
    context_input_ids = jax.random.randint(k_cids, (BATCH, SEQ), 0, VOCAB, jnp.int32)
    # attention masks: second example has 2 padded (masked-out) positions
    question_attention_mask = jnp.array(
        [[1] * SEQ, [1] * (SEQ - 2) + [0, 0]], dtype=jnp.int32)
    context_attention_mask = jnp.array(
        [[1] * SEQ, [1] * (SEQ - 2) + [0, 0]], dtype=jnp.int32)

    fwd = jax.jit(functools.partial(dpr_combined_forward, q_params, c_params, stacked))
    q_out, c_out = fwd(question_input_ids, question_attention_mask,
                       context_input_ids, context_attention_mask)
    jax.block_until_ready((q_out, c_out))

    assert q_out.shape == (BATCH, HIDDEN) and c_out.shape == (BATCH, HIDDEN)
    assert q_out.dtype == jnp.float32 and c_out.dtype == jnp.float32
    print("KERNEL_OK")
</pallas_src>

<mosaic_0001>
module attributes {stable_mosaic.version = 11 : i64} {
  func.func @encoder_stack_kernel(%arg0: i32, %arg1: i32, %arg2: memref<1x16x32xf32, #tpu.memory_space<vmem>>, %arg3: memref<1x2x8xf32, #tpu.memory_space<vmem>>, %arg4: memref<1x1x32xf32, #tpu.memory_space<vmem>>, %arg5: memref<1x1x32xf32, #tpu.memory_space<vmem>>, %arg6: memref<1x1x32x96xbf16, #tpu.memory_space<vmem>>, %arg7: memref<1x1x1x96xf32, #tpu.memory_space<vmem>>, %arg8: memref<1x1x32x32xbf16, #tpu.memory_space<vmem>>, %arg9: memref<1x1x1x32xf32, #tpu.memory_space<vmem>>, %arg10: memref<1x1x1x32xf32, #tpu.memory_space<vmem>>, %arg11: memref<1x1x1x32xf32, #tpu.memory_space<vmem>>, %arg12: memref<1x1x32x64xbf16, #tpu.memory_space<vmem>>, %arg13: memref<1x1x1x64xf32, #tpu.memory_space<vmem>>, %arg14: memref<1x1x64x32xbf16, #tpu.memory_space<vmem>>, %arg15: memref<1x1x1x32xf32, #tpu.memory_space<vmem>>, %arg16: memref<1x1x1x32xf32, #tpu.memory_space<vmem>>, %arg17: memref<1x1x1x32xf32, #tpu.memory_space<vmem>>, %arg18: memref<1x2x32xf32, #tpu.memory_space<vmem>>, %arg19: memref<16x32xf32, #tpu.memory_space<vmem>>, %arg20: memref<2x8xf32, #tpu.memory_space<vmem>>) attributes {dimension_semantics = [#tpu.dimension_semantics<parallel>, #tpu.dimension_semantics<arbitrary>], iteration_bounds = array<i64: 2, 2>, scalar_prefetch = 0 : i64, scratch_operands = 2 : i64, tpu.core_type = #tpu.core_type<tc>, window_params = [{transform_indices = @transform_0, window_bounds = array<i64: 1, 16, 32>}, {transform_indices = @transform_1, window_bounds = array<i64: 1, 2, 8>}, {transform_indices = @transform_2, window_bounds = array<i64: 1, 1, 32>}, {transform_indices = @transform_3, window_bounds = array<i64: 1, 1, 32>}, {transform_indices = @transform_4, window_bounds = array<i64: 1, 1, 32, 96>}, {transform_indices = @transform_5, window_bounds = array<i64: 1, 1, 1, 96>}, {transform_indices = @transform_6, window_bounds = array<i64: 1, 1, 32, 32>}, {transform_indices = @transform_7, window_bounds = array<i64: 1, 1, 1, 32>}, {transform_indices = @transform_8, window_bounds = array<i64: 1, 1, 1, 32>}, {transform_indices = @transform_9, window_bounds = array<i64: 1, 1, 1, 32>}, {transform_indices = @transform_10, window_bounds = array<i64: 1, 1, 32, 64>}, {transform_indices = @transform_11, window_bounds = array<i64: 1, 1, 1, 64>}, {transform_indices = @transform_12, window_bounds = array<i64: 1, 1, 64, 32>}, {transform_indices = @transform_13, window_bounds = array<i64: 1, 1, 1, 32>}, {transform_indices = @transform_14, window_bounds = array<i64: 1, 1, 1, 32>}, {transform_indices = @transform_15, window_bounds = array<i64: 1, 1, 1, 32>}, {transform_indices = @transform_16, window_bounds = array<i64: 1, 2, 32>}]} {
    %c0_i32 = arith.constant 0 : i32
    %0 = arith.cmpi eq, %arg1, %c0_i32 : i32
    %1 = arith.extui %0 : i1 to i32
    %c0_i32_0 = arith.constant 0 : i32
    %2 = arith.cmpi ne, %1, %c0_i32_0 : i32
    scf.if %2 {
      %c0_82 = arith.constant 0 : index
      %c0_83 = arith.constant 0 : index
      %c0_84 = arith.constant 0 : index
      %155 = vector.load %arg2[%c0_82, %c0_83, %c0_84] : memref<1x16x32xf32, #tpu.memory_space<vmem>>, vector<1x16x32xf32>
      %156 = vector.shape_cast %155 : vector<1x16x32xf32> to vector<16x32xf32>
      %c0_85 = arith.constant 0 : index
      %c0_86 = arith.constant 0 : index
      %c0_87 = arith.constant 0 : index
      %157 = vector.load %arg4[%c0_85, %c0_86, %c0_87] : memref<1x1x32xf32, #tpu.memory_space<vmem>>, vector<1x1x32xf32>
      %158 = vector.shape_cast %157 : vector<1x1x32xf32> to vector<1x32xf32>
      %c0_88 = arith.constant 0 : index
      %c0_89 = arith.constant 0 : index
      %c0_90 = arith.constant 0 : index
      %159 = vector.load %arg5[%c0_88, %c0_89, %c0_90] : memref<1x1x32xf32, #tpu.memory_space<vmem>>, vector<1x1x32xf32>
      %160 = vector.shape_cast %159 : vector<1x1x32xf32> to vector<1x32xf32>
      %cst_91 = arith.constant dense<0.000000e+00> : vector<16xf32>
      %161 = vector.multi_reduction <add>, %156, %cst_91 [1] : vector<16x32xf32> to vector<16xf32>
      %162 = vector.shape_cast %161 : vector<16xf32> to vector<16x1xf32>
      %cst_92 = arith.constant 3.200000e+01 : f32
      %163 = vector.broadcast %cst_92 : f32 to vector<16x1xf32>
      %164 = arith.divf %162, %163 : vector<16x1xf32>
      %165 = vector.broadcast %164 : vector<16x1xf32> to vector<16x32xf32>
      %166 = arith.subf %156, %165 : vector<16x32xf32>
      %167 = arith.mulf %166, %166 : vector<16x32xf32>
      %cst_93 = arith.constant dense<0.000000e+00> : vector<16xf32>
      %168 = vector.multi_reduction <add>, %167, %cst_93 [1] : vector<16x32xf32> to vector<16xf32>
      %169 = vector.shape_cast %168 : vector<16xf32> to vector<16x1xf32>
      %cst_94 = arith.constant 3.200000e+01 : f32
      %170 = vector.broadcast %cst_94 : f32 to vector<16x1xf32>
      %171 = arith.divf %169, %170 : vector<16x1xf32>
      %172 = vector.broadcast %164 : vector<16x1xf32> to vector<16x32xf32>
      %173 = arith.subf %156, %172 : vector<16x32xf32>
      %cst_95 = arith.constant 9.99999996E-13 : f32
      %174 = vector.broadcast %cst_95 : f32 to vector<16x1xf32>
      %175 = arith.addf %171, %174 : vector<16x1xf32>
      %176 = math.rsqrt %175 : vector<16x1xf32>
      %177 = vector.broadcast %176 : vector<16x1xf32> to vector<16x32xf32>
      %178 = arith.mulf %173, %177 : vector<16x32xf32>
      %179 = vector.broadcast %158 : vector<1x32xf32> to vector<16x32xf32>
      %180 = arith.mulf %178, %179 : vector<16x32xf32>
      %181 = vector.broadcast %160 : vector<1x32xf32> to vector<16x32xf32>
      %182 = arith.addf %180, %181 : vector<16x32xf32>
      %c0_96 = arith.constant 0 : index
      %c0_97 = arith.constant 0 : index
      %183 = vector.load %arg19[%c0_96, %c0_97] : memref<16x32xf32, #tpu.memory_space<vmem>>, vector<16x32xf32>
      tpu.vector_store %arg19[%c0_96, %c0_97], %182 {strides = array<i32>} : memref<16x32xf32, #tpu.memory_space<vmem>>, vector<16x32xf32>,
      %c0_98 = arith.constant 0 : index
      %c0_99 = arith.constant 0 : index
      %c0_100 = arith.constant 0 : index
      %184 = vector.load %arg3[%c0_98, %c0_99, %c0_100] : memref<1x2x8xf32, #tpu.memory_space<vmem>>, vector<1x2x8xf32>
      %185 = vector.shape_cast %184 : vector<1x2x8xf32> to vector<2x8xf32>
      %cst_101 = arith.constant 1.000000e+00 : f32
      %186 = vector.broadcast %cst_101 : f32 to vector<2x8xf32>
      %187 = arith.subf %186, %185 : vector<2x8xf32>
      %cst_102 = arith.constant -1.000000e+09 : f32
      %188 = vector.broadcast %cst_102 : f32 to vector<2x8xf32>
      %189 = arith.mulf %187, %188 : vector<2x8xf32>
      %c0_103 = arith.constant 0 : index
      %c0_104 = arith.constant 0 : index
      %190 = vector.load %arg20[%c0_103, %c0_104] : memref<2x8xf32, #tpu.memory_space<vmem>>, vector<2x8xf32>
      tpu.vector_store %arg20[%c0_103, %c0_104], %189 {strides = array<i32>} : memref<2x8xf32, #tpu.memory_space<vmem>>, vector<2x8xf32>,
    } else {
    }
    %c0 = arith.constant 0 : index
    %c0_1 = arith.constant 0 : index
    %3 = vector.load %arg19[%c0, %c0_1] : memref<16x32xf32, #tpu.memory_space<vmem>>, vector<16x32xf32>
    %4 = arith.truncf %3 : vector<16x32xf32> to vector<16x32xbf16>
    %c0_2 = arith.constant 0 : index
    %c0_3 = arith.constant 0 : index
    %c0_4 = arith.constant 0 : index
    %c0_5 = arith.constant 0 : index
    %5 = vector.load %arg6[%c0_2, %c0_3, %c0_4, %c0_5] : memref<1x1x32x96xbf16, #tpu.memory_space<vmem>>, vector<1x1x32x96xbf16>
    %6 = vector.shape_cast %5 : vector<1x1x32x96xbf16> to vector<32x96xbf16>
    %cst = arith.constant dense<0.000000e+00> : vector<16x96xf32>
    %7 = tpu.matmul %4, %6, %cst {dimension_numbers = #tpu.dot_dimension_numbers<[1], [0], [0], [1], [0, 0, 1, 1], [], []>} : vector<16x32xbf16>, vector<32x96xbf16>, vector<16x96xf32> -> vector<16x96xf32>
    %c0_6 = arith.constant 0 : index
    %c0_7 = arith.constant 0 : index
    %c0_8 = arith.constant 0 : index
    %c0_9 = arith.constant 0 : index
    %8 = vector.load %arg7[%c0_6, %c0_7, %c0_8, %c0_9] : memref<1x1x1x96xf32, #tpu.memory_space<vmem>>, vector<1x1x1x96xf32>
    %9 = vector.shape_cast %8 : vector<1x1x1x96xf32> to vector<1x96xf32>
    %10 = vector.broadcast %9 : vector<1x96xf32> to vector<16x96xf32>
    %11 = arith.addf %7, %10 : vector<16x96xf32>
    %c0_10 = arith.constant 0 : index
    %c0_11 = arith.constant 0 : index
    %12 = vector.load %arg20[%c0_10, %c0_11] : memref<2x8xf32, #tpu.memory_space<vmem>>, vector<2x8xf32>
    %13 = vector.shape_cast %12 : vector<2x8xf32> to vector<2x1x8xf32>
    %14 = vector.extract_strided_slice %11 {offsets = [0, 0], sizes = [16, 16], strides = [1, 1]} : vector<16x96xf32> to vector<16x16xf32>
    %15 = vector.shape_cast %14 : vector<16x16xf32> to vector<2x8x16xf32>
    %16 = vector.extract_strided_slice %11 {offsets = [0, 32], sizes = [16, 16], strides = [1, 1]} : vector<16x96xf32> to vector<16x16xf32>
    %17 = vector.shape_cast %16 : vector<16x16xf32> to vector<2x8x16xf32>
    %18 = vector.extract_strided_slice %11 {offsets = [0, 64], sizes = [16, 16], strides = [1, 1]} : vector<16x96xf32> to vector<16x16xf32>
    %19 = vector.shape_cast %18 : vector<16x16xf32> to vector<2x8x16xf32>
    "tpu.trace_start"() <{level = 10 : i32, message = "bqd,bkd->bqk"}> : () -> ()
    %cst_12 = arith.constant dense<0.000000e+00> : vector<2x8x8xf32>
    %20 = tpu.matmul %15, %17, %cst_12 {dimension_numbers = #tpu.dot_dimension_numbers<[2], [2], [1], [1], [0, 0, 0, 1, 1, 1], [0], [0]>} : vector<2x8x16xf32>, vector<2x8x16xf32>, vector<2x8x8xf32> -> vector<2x8x8xf32>
    "tpu.trace_stop"() : () -> ()
    %cst_13 = arith.constant 2.500000e-01 : f32
    %21 = vector.broadcast %cst_13 : f32 to vector<2x8x8xf32>
    %22 = arith.mulf %20, %21 : vector<2x8x8xf32>
    %23 = vector.broadcast %13 : vector<2x1x8xf32> to vector<2x8x8xf32>
    %24 = arith.addf %22, %23 : vector<2x8x8xf32>
    %cst_14 = arith.constant dense<0xFF800000> : vector<2x8xf32>
    %25 = vector.multi_reduction <maximumf>, %24, %cst_14 [2] : vector<2x8x8xf32> to vector<2x8xf32>
    %26 = vector.shape_cast %25 : vector<2x8xf32> to vector<2x8x1xf32>
    %27 = vector.broadcast %26 : vector<2x8x1xf32> to vector<2x8x8xf32>
    %28 = arith.subf %24, %27 : vector<2x8x8xf32>
    %29 = math.exp %28 : vector<2x8x8xf32>
    %cst_15 = arith.constant dense<0.000000e+00> : vector<2x8xf32>
    %30 = vector.multi_reduction <add>, %29, %cst_15 [2] : vector<2x8x8xf32> to vector<2x8xf32>
    %31 = vector.shape_cast %30 : vector<2x8xf32> to vector<2x8x1xf32>
    %32 = tpu.reciprocal %31 {approx = true} : vector<2x8x1xf32> -> vector<2x8x1xf32>
    %33 = vector.broadcast %32 : vector<2x8x1xf32> to vector<2x8x8xf32>
    %34 = arith.mulf %29, %33 : vector<2x8x8xf32>
    "tpu.trace_start"() <{level = 10 : i32, message = "bqk,bkd->bqd"}> : () -> ()
    %cst_16 = arith.constant dense<0.000000e+00> : vector<2x8x16xf32>
    %35 = tpu.matmul %34, %19, %cst_16 {dimension_numbers = #tpu.dot_dimension_numbers<[2], [1], [1], [2], [0, 0, 0, 1, 1, 2], [0], [0]>} : vector<2x8x8xf32>, vector<2x8x16xf32>, vector<2x8x16xf32> -> vector<2x8x16xf32>
    "tpu.trace_stop"() : () -> ()
    %36 = vector.extract_strided_slice %11 {offsets = [0, 16], sizes = [16, 16], strides = [1, 1]} : vector<16x96xf32> to vector<16x16xf32>
    %37 = vector.shape_cast %36 : vector<16x16xf32> to vector<2x8x16xf32>
    %38 = vector.extract_strided_slice %11 {offsets = [0, 48], sizes = [16, 16], strides = [1, 1]} : vector<16x96xf32> to vector<16x16xf32>
    %39 = vector.shape_cast %38 : vector<16x16xf32> to vector<2x8x16xf32>
    %40 = vector.extract_strided_slice %11 {offsets = [0, 80], sizes = [16, 16], strides = [1, 1]} : vector<16x96xf32> to vector<16x16xf32>
    %41 = vector.shape_cast %40 : vector<16x16xf32> to vector<2x8x16xf32>
    "tpu.trace_start"() <{level = 10 : i32, message = "bqd,bkd->bqk"}> : () -> ()
    %cst_17 = arith.constant dense<0.000000e+00> : vector<2x8x8xf32>
    %42 = tpu.matmul %37, %39, %cst_17 {dimension_numbers = #tpu.dot_dimension_numbers<[2], [2], [1], [1], [0, 0, 0, 1, 1, 1], [0], [0]>} : vector<2x8x16xf32>, vector<2x8x16xf32>, vector<2x8x8xf32> -> vector<2x8x8xf32>
    "tpu.trace_stop"() : () -> ()
    %cst_18 = arith.constant 2.500000e-01 : f32
    %43 = vector.broadcast %cst_18 : f32 to vector<2x8x8xf32>
    %44 = arith.mulf %42, %43 : vector<2x8x8xf32>
    %45 = vector.broadcast %13 : vector<2x1x8xf32> to vector<2x8x8xf32>
    %46 = arith.addf %44, %45 : vector<2x8x8xf32>
    %cst_19 = arith.constant dense<0xFF800000> : vector<2x8xf32>
    %47 = vector.multi_reduction <maximumf>, %46, %cst_19 [2] : vector<2x8x8xf32> to vector<2x8xf32>
    %48 = vector.shape_cast %47 : vector<2x8xf32> to vector<2x8x1xf32>
    %49 = vector.broadcast %48 : vector<2x8x1xf32> to vector<2x8x8xf32>
    %50 = arith.subf %46, %49 : vector<2x8x8xf32>
    %51 = math.exp %50 : vector<2x8x8xf32>
    %cst_20 = arith.constant dense<0.000000e+00> : vector<2x8xf32>
    %52 = vector.multi_reduction <add>, %51, %cst_20 [2] : vector<2x8x8xf32> to vector<2x8xf32>
    %53 = vector.shape_cast %52 : vector<2x8xf32> to vector<2x8x1xf32>
    %54 = tpu.reciprocal %53 {approx = true} : vector<2x8x1xf32> -> vector<2x8x1xf32>
    %55 = vector.broadcast %54 : vector<2x8x1xf32> to vector<2x8x8xf32>
    %56 = arith.mulf %51, %55 : vector<2x8x8xf32>
    "tpu.trace_start"() <{level = 10 : i32, message = "bqk,bkd->bqd"}> : () -> ()
    %cst_21 = arith.constant dense<0.000000e+00> : vector<2x8x16xf32>
    %57 = tpu.matmul %56, %41, %cst_21 {dimension_numbers = #tpu.dot_dimension_numbers<[2], [1], [1], [2], [0, 0, 0, 1, 1, 2], [0], [0]>} : vector<2x8x8xf32>, vector<2x8x16xf32>, vector<2x8x16xf32> -> vector<2x8x16xf32>
    "tpu.trace_stop"() : () -> ()
    %58 = tpu.concatenate %35, %57 in 2 : vector<2x8x16xf32>, vector<2x8x16xf32> -> vector<2x8x32xf32>
    %59 = vector.shape_cast %58 : vector<2x8x32xf32> to vector<16x32xf32>
    %60 = arith.truncf %59 : vector<16x32xf32> to vector<16x32xbf16>
    %c0_22 = arith.constant 0 : index
    %c0_23 = arith.constant 0 : index
    %c0_24 = arith.constant 0 : index
    %c0_25 = arith.constant 0 : index
    %61 = vector.load %arg8[%c0_22, %c0_23, %c0_24, %c0_25] : memref<1x1x32x32xbf16, #tpu.memory_space<vmem>>, vector<1x1x32x32xbf16>
    %62 = vector.shape_cast %61 : vector<1x1x32x32xbf16> to vector<32x32xbf16>
    %cst_26 = arith.constant dense<0.000000e+00> : vector<16x32xf32>
    %63 = tpu.matmul %60, %62, %cst_26 {dimension_numbers = #tpu.dot_dimension_numbers<[1], [0], [0], [1], [0, 0, 1, 1], [], []>} : vector<16x32xbf16>, vector<32x32xbf16>, vector<16x32xf32> -> vector<16x32xf32>
    %c0_27 = arith.constant 0 : index
    %c0_28 = arith.constant 0 : index
    %c0_29 = arith.constant 0 : index
    %c0_30 = arith.constant 0 : index
    %64 = vector.load %arg9[%c0_27, %c0_28, %c0_29, %c0_30] : memref<1x1x1x32xf32, #tpu.memory_space<vmem>>, vector<1x1x1x32xf32>
    %65 = vector.shape_cast %64 : vector<1x1x1x32xf32> to vector<1x32xf32>
    %66 = vector.broadcast %65 : vector<1x32xf32> to vector<16x32xf32>
    %67 = arith.addf %63, %66 : vector<16x32xf32>
    %68 = arith.addf %3, %67 : vector<16x32xf32>
    %c0_31 = arith.constant 0 : index
    %c0_32 = arith.constant 0 : index
    %c0_33 = arith.constant 0 : index
    %c0_34 = arith.constant 0 : index
    %69 = vector.load %arg10[%c0_31, %c0_32, %c0_33, %c0_34] : memref<1x1x1x32xf32, #tpu.memory_space<vmem>>, vector<1x1x1x32xf32>
    %70 = vector.shape_cast %69 : vector<1x1x1x32xf32> to vector<1x32xf32>
    %c0_35 = arith.constant 0 : index
    %c0_36 = arith.constant 0 : index
    %c0_37 = arith.constant 0 : index
    %c0_38 = arith.constant 0 : index
    %71 = vector.load %arg11[%c0_35, %c0_36, %c0_37, %c0_38] : memref<1x1x1x32xf32, #tpu.memory_space<vmem>>, vector<1x1x1x32xf32>
    %72 = vector.shape_cast %71 : vector<1x1x1x32xf32> to vector<1x32xf32>
    %cst_39 = arith.constant dense<0.000000e+00> : vector<16xf32>
    %73 = vector.multi_reduction <add>, %68, %cst_39 [1] : vector<16x32xf32> to vector<16xf32>
    %74 = vector.shape_cast %73 : vector<16xf32> to vector<16x1xf32>
    %cst_40 = arith.constant 3.200000e+01 : f32
    %75 = vector.broadcast %cst_40 : f32 to vector<16x1xf32>
    %76 = arith.divf %74, %75 : vector<16x1xf32>
    %77 = vector.broadcast %76 : vector<16x1xf32> to vector<16x32xf32>
    %78 = arith.subf %68, %77 : vector<16x32xf32>
    %79 = arith.mulf %78, %78 : vector<16x32xf32>
    %cst_41 = arith.constant dense<0.000000e+00> : vector<16xf32>
    %80 = vector.multi_reduction <add>, %79, %cst_41 [1] : vector<16x32xf32> to vector<16xf32>
    %81 = vector.shape_cast %80 : vector<16xf32> to vector<16x1xf32>
    %cst_42 = arith.constant 3.200000e+01 : f32
    %82 = vector.broadcast %cst_42 : f32 to vector<16x1xf32>
    %83 = arith.divf %81, %82 : vector<16x1xf32>
    %84 = vector.broadcast %76 : vector<16x1xf32> to vector<16x32xf32>
    %85 = arith.subf %68, %84 : vector<16x32xf32>
    %cst_43 = arith.constant 9.99999996E-13 : f32
    %86 = vector.broadcast %cst_43 : f32 to vector<16x1xf32>
    %87 = arith.addf %83, %86 : vector<16x1xf32>
    %88 = math.rsqrt %87 : vector<16x1xf32>
    %89 = vector.broadcast %88 : vector<16x1xf32> to vector<16x32xf32>
    %90 = arith.mulf %85, %89 : vector<16x32xf32>
    %91 = vector.broadcast %70 : vector<1x32xf32> to vector<16x32xf32>
    %92 = arith.mulf %90, %91 : vector<16x32xf32>
    %93 = vector.broadcast %72 : vector<1x32xf32> to vector<16x32xf32>
    %94 = arith.addf %92, %93 : vector<16x32xf32>
    %95 = arith.truncf %94 : vector<16x32xf32> to vector<16x32xbf16>
    %c0_44 = arith.constant 0 : index
    %c0_45 = arith.constant 0 : index
    %c0_46 = arith.constant 0 : index
    %c0_47 = arith.constant 0 : index
    %96 = vector.load %arg12[%c0_44, %c0_45, %c0_46, %c0_47] : memref<1x1x32x64xbf16, #tpu.memory_space<vmem>>, vector<1x1x32x64xbf16>
    %97 = vector.shape_cast %96 : vector<1x1x32x64xbf16> to vector<32x64xbf16>
    %cst_48 = arith.constant dense<0.000000e+00> : vector<16x64xf32>
    %98 = tpu.matmul %95, %97, %cst_48 {dimension_numbers = #tpu.dot_dimension_numbers<[1], [0], [0], [1], [0, 0, 1, 1], [], []>} : vector<16x32xbf16>, vector<32x64xbf16>, vector<16x64xf32> -> vector<16x64xf32>
    %c0_49 = arith.constant 0 : index
    %c0_50 = arith.constant 0 : index
    %c0_51 = arith.constant 0 : index
    %c0_52 = arith.constant 0 : index
    %99 = vector.load %arg13[%c0_49, %c0_50, %c0_51, %c0_52] : memref<1x1x1x64xf32, #tpu.memory_space<vmem>>, vector<1x1x1x64xf32>
    %100 = vector.shape_cast %99 : vector<1x1x1x64xf32> to vector<1x64xf32>
    %101 = vector.broadcast %100 : vector<1x64xf32> to vector<16x64xf32>
    %102 = arith.addf %98, %101 : vector<16x64xf32>
    %cst_53 = arith.constant 5.000000e-01 : f32
    %103 = vector.broadcast %cst_53 : f32 to vector<16x64xf32>
    %104 = arith.mulf %103, %102 : vector<16x64xf32>
    %cst_54 = arith.constant 4.471500e-02 : f32
    %105 = vector.broadcast %cst_54 : f32 to vector<16x64xf32>
    %106 = arith.mulf %105, %102 : vector<16x64xf32>
    %107 = arith.mulf %106, %102 : vector<16x64xf32>
    %108 = arith.mulf %107, %102 : vector<16x64xf32>
    %109 = arith.addf %102, %108 : vector<16x64xf32>
    %cst_55 = arith.constant 0.797884583 : f32
    %110 = vector.broadcast %cst_55 : f32 to vector<16x64xf32>
    %111 = arith.mulf %110, %109 : vector<16x64xf32>
    %112 = math.tanh %111 : vector<16x64xf32>
    %cst_56 = arith.constant 1.000000e+00 : f32
    %113 = vector.broadcast %cst_56 : f32 to vector<16x64xf32>
    %114 = arith.addf %113, %112 : vector<16x64xf32>
    %115 = arith.mulf %104, %114 : vector<16x64xf32>
    %116 = arith.truncf %115 : vector<16x64xf32> to vector<16x64xbf16>
    %c0_57 = arith.constant 0 : index
    %c0_58 = arith.constant 0 : index
    %c0_59 = arith.constant 0 : index
    %c0_60 = arith.constant 0 : index
    %117 = vector.load %arg14[%c0_57, %c0_58, %c0_59, %c0_60] : memref<1x1x64x32xbf16, #tpu.memory_space<vmem>>, vector<1x1x64x32xbf16>
    %118 = vector.shape_cast %117 : vector<1x1x64x32xbf16> to vector<64x32xbf16>
    %cst_61 = arith.constant dense<0.000000e+00> : vector<16x32xf32>
    %119 = tpu.matmul %116, %118, %cst_61 {dimension_numbers = #tpu.dot_dimension_numbers<[1], [0], [0], [1], [0, 0, 1, 1], [], []>} : vector<16x64xbf16>, vector<64x32xbf16>, vector<16x32xf32> -> vector<16x32xf32>
    %c0_62 = arith.constant 0 : index
    %c0_63 = arith.constant 0 : index
    %c0_64 = arith.constant 0 : index
    %c0_65 = arith.constant 0 : index
    %120 = vector.load %arg15[%c0_62, %c0_63, %c0_64, %c0_65] : memref<1x1x1x32xf32, #tpu.memory_space<vmem>>, vector<1x1x1x32xf32>
    %121 = vector.shape_cast %120 : vector<1x1x1x32xf32> to vector<1x32xf32>
    %122 = vector.broadcast %121 : vector<1x32xf32> to vector<16x32xf32>
    %123 = arith.addf %119, %122 : vector<16x32xf32>
    %124 = arith.addf %94, %123 : vector<16x32xf32>
    %c0_66 = arith.constant 0 : index
    %c0_67 = arith.constant 0 : index
    %c0_68 = arith.constant 0 : index
    %c0_69 = arith.constant 0 : index
    %125 = vector.load %arg16[%c0_66, %c0_67, %c0_68, %c0_69] : memref<1x1x1x32xf32, #tpu.memory_space<vmem>>, vector<1x1x1x32xf32>
    %126 = vector.shape_cast %125 : vector<1x1x1x32xf32> to vector<1x32xf32>
    %c0_70 = arith.constant 0 : index
    %c0_71 = arith.constant 0 : index
    %c0_72 = arith.constant 0 : index
    %c0_73 = arith.constant 0 : index
    %127 = vector.load %arg17[%c0_70, %c0_71, %c0_72, %c0_73] : memref<1x1x1x32xf32, #tpu.memory_space<vmem>>, vector<1x1x1x32xf32>
    %128 = vector.shape_cast %127 : vector<1x1x1x32xf32> to vector<1x32xf32>
    %cst_74 = arith.constant dense<0.000000e+00> : vector<16xf32>
    %129 = vector.multi_reduction <add>, %124, %cst_74 [1] : vector<16x32xf32> to vector<16xf32>
    %130 = vector.shape_cast %129 : vector<16xf32> to vector<16x1xf32>
    %cst_75 = arith.constant 3.200000e+01 : f32
    %131 = vector.broadcast %cst_75 : f32 to vector<16x1xf32>
    %132 = arith.divf %130, %131 : vector<16x1xf32>
    %133 = vector.broadcast %132 : vector<16x1xf32> to vector<16x32xf32>
    %134 = arith.subf %124, %133 : vector<16x32xf32>
    %135 = arith.mulf %134, %134 : vector<16x32xf32>
    %cst_76 = arith.constant dense<0.000000e+00> : vector<16xf32>
    %136 = vector.multi_reduction <add>, %135, %cst_76 [1] : vector<16x32xf32> to vector<16xf32>
    %137 = vector.shape_cast %136 : vector<16xf32> to vector<16x1xf32>
    %cst_77 = arith.constant 3.200000e+01 : f32
    %138 = vector.broadcast %cst_77 : f32 to vector<16x1xf32>
    %139 = arith.divf %137, %138 : vector<16x1xf32>
    %140 = vector.broadcast %132 : vector<16x1xf32> to vector<16x32xf32>
    %141 = arith.subf %124, %140 : vector<16x32xf32>
    %cst_78 = arith.constant 9.99999996E-13 : f32
    %142 = vector.broadcast %cst_78 : f32 to vector<16x1xf32>
    %143 = arith.addf %139, %142 : vector<16x1xf32>
    %144 = math.rsqrt %143 : vector<16x1xf32>
    %145 = vector.broadcast %144 : vector<16x1xf32> to vector<16x32xf32>
    %146 = arith.mulf %141, %145 : vector<16x32xf32>
    %147 = vector.broadcast %126 : vector<1x32xf32> to vector<16x32xf32>
    %148 = arith.mulf %146, %147 : vector<16x32xf32>
    %149 = vector.broadcast %128 : vector<1x32xf32> to vector<16x32xf32>
    %150 = arith.addf %148, %149 : vector<16x32xf32>
    %c0_79 = arith.constant 0 : index
    %c0_80 = arith.constant 0 : index
    %151 = vector.load %arg19[%c0_79, %c0_80] : memref<16x32xf32, #tpu.memory_space<vmem>>, vector<16x32xf32>
    tpu.vector_store %arg19[%c0_79, %c0_80], %150 {strides = array<i32>} : memref<16x32xf32, #tpu.memory_space<vmem>>, vector<16x32xf32>,
    %c1_i32 = arith.constant 1 : i32
    %152 = arith.cmpi eq, %arg1, %c1_i32 : i32
    %153 = arith.extui %152 : i1 to i32
    %c0_i32_81 = arith.constant 0 : i32
    %154 = arith.cmpi ne, %153, %c0_i32_81 : i32
    scf.if %154 {
      %155 = tpu.iota {dimensions = array<i32: 1>} : vector<2x16xi32>
      %156 = tpu.iota {dimensions = array<i32: 0>} : vector<2x16xi32>
      %c8_i32 = arith.constant 8 : i32
      %157 = vector.broadcast %c8_i32 : i32 to vector<2x16xi32>
      %158 = arith.muli %156, %157 : vector<2x16xi32>
      %159 = arith.cmpi eq, %155, %158 : vector<2x16xi32>
      %160 = arith.extui %159 : vector<2x16xi1> to vector<2x16xi32>
      %161 = arith.sitofp %160 : vector<2x16xi32> to vector<2x16xf32>
      %cst_82 = arith.constant dense<0.000000e+00> : vector<2x32xf32>
      %162 = tpu.matmul %161, %150, %cst_82 {dimension_numbers = #tpu.dot_dimension_numbers<[1], [0], [0], [1], [0, 0, 1, 1], [], []>} : vector<2x16xf32>, vector<16x32xf32>, vector<2x32xf32> -> vector<2x32xf32>
      %c0_83 = arith.constant 0 : index
      %c0_84 = arith.constant 0 : index
      %c0_85 = arith.constant 0 : index
      %163 = vector.load %arg18[%c0_83, %c0_84, %c0_85] : memref<1x2x32xf32, #tpu.memory_space<vmem>>, vector<1x2x32xf32>
      %164 = vector.shape_cast %163 : vector<1x2x32xf32> to vector<2x32xf32>
      %165 = vector.shape_cast %162 : vector<2x32xf32> to vector<1x2x32xf32>
      tpu.vector_store %arg18[%c0_83, %c0_84, %c0_85], %165 {strides = array<i32>} : memref<1x2x32xf32, #tpu.memory_space<vmem>>, vector<1x2x32xf32>,
    } else {
    }
    return
  }
  func.func @transform_0(%arg0: i32, %arg1: i32) -> (i32, i32, i32) {
    %c0_i32 = arith.constant 0 : i32
    %c0_i32_0 = arith.constant 0 : i32
    %c0_i32_1 = arith.constant 0 : i32
    return %arg0, %c0_i32, %c0_i32_0 : i32, i32, i32
  }
  func.func @transform_1(%arg0: i32, %arg1: i32) -> (i32, i32, i32) {
    %c0_i32 = arith.constant 0 : i32
    %c0_i32_0 = arith.constant 0 : i32
    %c0_i32_1 = arith.constant 0 : i32
    return %arg0, %c0_i32, %c0_i32_0 : i32, i32, i32
  }
  func.func @transform_2(%arg0: i32, %arg1: i32) -> (i32, i32, i32) {
    %c0_i32 = arith.constant 0 : i32
    %c0_i32_0 = arith.constant 0 : i32
    %c0_i32_1 = arith.constant 0 : i32
    return %arg0, %c0_i32, %c0_i32_0 : i32, i32, i32
  }
  func.func @transform_3(%arg0: i32, %arg1: i32) -> (i32, i32, i32) {
    %c0_i32 = arith.constant 0 : i32
    %c0_i32_0 = arith.constant 0 : i32
    %c0_i32_1 = arith.constant 0 : i32
    return %arg0, %c0_i32, %c0_i32_0 : i32, i32, i32
  }
  func.func @transform_4(%arg0: i32, %arg1: i32) -> (i32, i32, i32, i32) {
    %c0_i32 = arith.constant 0 : i32
    %c0_i32_0 = arith.constant 0 : i32
    %c0_i32_1 = arith.constant 0 : i32
    return %arg0, %arg1, %c0_i32, %c0_i32_0 : i32, i32, i32, i32
  }
  func.func @transform_5(%arg0: i32, %arg1: i32) -> (i32, i32, i32, i32) {
    %c0_i32 = arith.constant 0 : i32
    %c0_i32_0 = arith.constant 0 : i32
    %c0_i32_1 = arith.constant 0 : i32
    return %arg0, %arg1, %c0_i32, %c0_i32_0 : i32, i32, i32, i32
  }
  func.func @transform_6(%arg0: i32, %arg1: i32) -> (i32, i32, i32, i32) {
    %c0_i32 = arith.constant 0 : i32
    %c0_i32_0 = arith.constant 0 : i32
    %c0_i32_1 = arith.constant 0 : i32
    return %arg0, %arg1, %c0_i32, %c0_i32_0 : i32, i32, i32, i32
  }
  func.func @transform_7(%arg0: i32, %arg1: i32) -> (i32, i32, i32, i32) {
    %c0_i32 = arith.constant 0 : i32
    %c0_i32_0 = arith.constant 0 : i32
    %c0_i32_1 = arith.constant 0 : i32
    return %arg0, %arg1, %c0_i32, %c0_i32_0 : i32, i32, i32, i32
  }
  func.func @transform_8(%arg0: i32, %arg1: i32) -> (i32, i32, i32, i32) {
    %c0_i32 = arith.constant 0 : i32
    %c0_i32_0 = arith.constant 0 : i32
    %c0_i32_1 = arith.constant 0 : i32
    return %arg0, %arg1, %c0_i32, %c0_i32_0 : i32, i32, i32, i32
  }
  func.func @transform_9(%arg0: i32, %arg1: i32) -> (i32, i32, i32, i32) {
    %c0_i32 = arith.constant 0 : i32
    %c0_i32_0 = arith.constant 0 : i32
    %c0_i32_1 = arith.constant 0 : i32
    return %arg0, %arg1, %c0_i32, %c0_i32_0 : i32, i32, i32, i32
  }
  func.func @transform_10(%arg0: i32, %arg1: i32) -> (i32, i32, i32, i32) {
    %c0_i32 = arith.constant 0 : i32
    %c0_i32_0 = arith.constant 0 : i32
    %c0_i32_1 = arith.constant 0 : i32
    return %arg0, %arg1, %c0_i32, %c0_i32_0 : i32, i32, i32, i32
  }
  func.func @transform_11(%arg0: i32, %arg1: i32) -> (i32, i32, i32, i32) {
    %c0_i32 = arith.constant 0 : i32
    %c0_i32_0 = arith.constant 0 : i32
    %c0_i32_1 = arith.constant 0 : i32
    return %arg0, %arg1, %c0_i32, %c0_i32_0 : i32, i32, i32, i32
  }
  func.func @transform_12(%arg0: i32, %arg1: i32) -> (i32, i32, i32, i32) {
    %c0_i32 = arith.constant 0 : i32
    %c0_i32_0 = arith.constant 0 : i32
    %c0_i32_1 = arith.constant 0 : i32
    return %arg0, %arg1, %c0_i32, %c0_i32_0 : i32, i32, i32, i32
  }
  func.func @transform_13(%arg0: i32, %arg1: i32) -> (i32, i32, i32, i32) {
    %c0_i32 = arith.constant 0 : i32
    %c0_i32_0 = arith.constant 0 : i32
    %c0_i32_1 = arith.constant 0 : i32
    return %arg0, %arg1, %c0_i32, %c0_i32_0 : i32, i32, i32, i32
  }
  func.func @transform_14(%arg0: i32, %arg1: i32) -> (i32, i32, i32, i32) {
    %c0_i32 = arith.constant 0 : i32
    %c0_i32_0 = arith.constant 0 : i32
    %c0_i32_1 = arith.constant 0 : i32
    return %arg0, %arg1, %c0_i32, %c0_i32_0 : i32, i32, i32, i32
  }
  func.func @transform_15(%arg0: i32, %arg1: i32) -> (i32, i32, i32, i32) {
    %c0_i32 = arith.constant 0 : i32
    %c0_i32_0 = arith.constant 0 : i32
    %c0_i32_1 = arith.constant 0 : i32
    return %arg0, %arg1, %c0_i32, %c0_i32_0 : i32, i32, i32, i32
  }
  func.func @transform_16(%arg0: i32, %arg1: i32) -> (i32, i32, i32) {
    %c0_i32 = arith.constant 0 : i32
    %c0_i32_0 = arith.constant 0 : i32
    %c0_i32_1 = arith.constant 0 : i32
    return %arg0, %c0_i32, %c0_i32_0 : i32, i32, i32
  }
}

</mosaic_0001>

<llo_original>
// kernel: dpr_combined_forward.1
$region0: #{dpr_combined_forward.1}
  #allocation0 [shape = 'u32[]', space=smem, size = 0x4, offset = 0x4, fixed_abs, tag = 'smem constant byte address 0x4 - core index']
  #allocation1 [shape = 'u32[144,128]{1,0:T(1,128)}', space=vmem, size = 0x12000, scoped, tag = 'internal scratch']
  #allocation2 [shape = 'f32[16,32]{1,0:T(8,128)}', space=vmem, size = 0x2000, scoped, tag = 'scratch operand']
  #allocation3 [shape = 'f32[2,8]{1,0:T(2,128)}', space=vmem, size = 0x400, scoped, tag = 'scratch operand']
  %s0 = inlined_call_operand.vmem [shape: f32[2,16,32], index: 0, kind: input, shape index: {}]
  %s1 = inlined_call_operand.vmem [shape: f32[2,2,8], index: 1, kind: input, shape index: {}]
  %s2 = inlined_call_operand.vmem [shape: f32[2,1,32], index: 2, kind: input, shape index: {}]
  %s3 = inlined_call_operand.vmem [shape: f32[2,1,32], index: 3, kind: input, shape index: {}]
  %s4 = inlined_call_operand.vmem [shape: bf16[2,2,32,96], index: 4, kind: input, shape index: {}]
  %s5 = inlined_call_operand.vmem [shape: f32[2,2,1,96], index: 5, kind: input, shape index: {}]
  %s6 = inlined_call_operand.vmem [shape: bf16[2,2,32,32], index: 6, kind: input, shape index: {}]
  %s7 = inlined_call_operand.vmem [shape: f32[2,2,1,32], index: 7, kind: input, shape index: {}, may-alias: {7,9,13,15}]
  %s8 = inlined_call_operand.vmem [shape: f32[2,2,1,32], index: 8, kind: input, shape index: {}, may-alias: {8,14}]
  %s9 = inlined_call_operand.vmem [shape: f32[2,2,1,32], index: 9, kind: input, shape index: {}, may-alias: {7,9,13,15}]
  %s10 = inlined_call_operand.vmem [shape: bf16[2,2,32,64], index: 10, kind: input, shape index: {}]
  %s11 = inlined_call_operand.vmem [shape: f32[2,2,1,64], index: 11, kind: input, shape index: {}]
  %s12 = inlined_call_operand.vmem [shape: bf16[2,2,64,32], index: 12, kind: input, shape index: {}]
  %s13 = inlined_call_operand.vmem [shape: f32[2,2,1,32], index: 13, kind: input, shape index: {}, may-alias: {7,9,13,15}]
  %s14 = inlined_call_operand.vmem [shape: f32[2,2,1,32], index: 14, kind: input, shape index: {}, may-alias: {8,14}]
  %s15 = inlined_call_operand.vmem [shape: f32[2,2,1,32], index: 15, kind: input, shape index: {}, may-alias: {7,9,13,15}]
  %s16 = inlined_call_operand.vmem [shape: f32[2,2,32], index: 16, kind: output, shape index: {}]
  %s17 = sld [smem:[#allocation0]]
  $region105: #{dpr_combined_forward.1} parent=0
    _
  %s19 = ssub.s32 1, %s17
  %s20 = scalar_select 0, %s19, %s17
  loop: start=0, step=1, limit=6
  $region2: #{dpr_combined_forward.1} parent=0 // loop_pre_header
    _
  $region3: #{dpr_combined_forward.1} parent=0 // loop_header
    %s22 = sphi 0, %s26
    %p23 = scmp.ge.s32.totalorder %s22, 6
    %s29 = sphi 0, %s41
    %s30 = sphi 0, %s37
    %s31 = sphi 0, %s29
    %s32 = sphi 0, %s30
    %s33 = sphi 0, %s31
    %s34 = sphi 0, %s32
    %s44 = sphi 0, %s46
    %s47 = sphi 0, %s44
    %s48 = sphi 0, %s47
    %s64 = sphi 0, %s48
    %s70 = sphi 0, %s72
    %s73 = sphi 0, %s70
    %s74 = sphi 0, %s73
    %s90 = sphi 0, %s74
    %s96 = sphi 0, %s98
    %s99 = sphi 0, %s96
    %s100 = sphi 0, %s99
    %s116 = sphi 0, %s100
    %s122 = sphi 0, %s124
    %s125 = sphi 0, %s122
    %s126 = sphi 0, %s125
    %s142 = sphi 0, %s126
    %s150 = sphi 0, %s152
    %s153 = sphi 0, %s150
    %s154 = sphi 0, %s153
    %s170 = sphi 0, %s154
    %s178 = sphi 0, %s180
    %s181 = sphi 0, %s178
    %s182 = sphi 0, %s181
    %s198 = sphi 0, %s182
    %s206 = sphi 0, %s208
    %s209 = sphi 0, %s206
    %s210 = sphi 0, %s209
    %s226 = sphi 0, %s210
    %s234 = sphi 0, %s236
    %s237 = sphi 0, %s234
    %s238 = sphi 0, %s237
    %s254 = sphi 0, %s238
    %s262 = sphi 0, %s264
    %s265 = sphi 0, %s262
    %s266 = sphi 0, %s265
    %s282 = sphi 0, %s266
    %s290 = sphi 0, %s292
    %s293 = sphi 0, %s290
    %s294 = sphi 0, %s293
    %s310 = sphi 0, %s294
    %s318 = sphi 0, %s320
    %s321 = sphi 0, %s318
    %s322 = sphi 0, %s321
    %s338 = sphi 0, %s322
    %s346 = sphi 0, %s348
    %s349 = sphi 0, %s346
    %s350 = sphi 0, %s349
    %s366 = sphi 0, %s350
    %s374 = sphi 0, %s376
    %s377 = sphi 0, %s374
    %s378 = sphi 0, %s377
    %s394 = sphi 0, %s378
    %s402 = sphi 0, %s404
    %s405 = sphi 0, %s402
    %s406 = sphi 0, %s405
    %s422 = sphi 0, %s406
    %s430 = sphi 0, %s432
    %s433 = sphi 0, %s430
    %s434 = sphi 0, %s433
    %s450 = sphi 0, %s434
    %s458 = sphi 0, %s460
    %s461 = sphi 0, %s458
    %s462 = sphi 0, %s461
    %s478 = sphi 0, %s462
    %s484 = sphi 0, %s486
    %s487 = sphi 0, %s484
    %s488 = sphi 0, %s487
    %s504 = sphi 0, %s488
  $region4: #{dpr_combined_forward.1} parent=0 // loop_header_branch
    %25 = sbr.rel (%p23) target = $region8
  $region5: #{dpr_combined_forward.1} parent=0 // loop_body
    %s27 = ssub.s32 %s22, 1
    %s28 = ssub.s32 %s22, 2
    %s35 = sadd.s32 1, %s30
    %p36 = scmp.ge.s32.totalorder %s35, 2
    %s37 = scalar_select %p36, 0, %s35
    %s38 = sadd.s32 1, %s29
    %s39 = scalar_select %p36, %s38, %s29
    %p40 = scmp.ge.s32.totalorder %s39, 2
    %s41 = scalar_select %p40, 0, %s39
    %s42 = ssub.s32 %s29, %s41
    %p43 = scmp.eq.s32.totalorder %s42, 0
    %s45 = sadd.s32 %s44, 1
    %s46 = scalar_select %p43, %s44, %s45
    %p49 = pneg %p43
    %p50 = scmp.eq.s32.totalorder %s22, 3
    %p51 = por %p49, %p50
    %p52 = scmp.ne.s32.totalorder %s44, %s47
    %p53 = scmp.eq.s32.totalorder %s22, 0
    %p54 = por %p52, %p53
    %p55 = scmp.ne.s32.totalorder %s44, %s47
    %p56 = scmp.eq.s32.totalorder %s27, 3
    %p57 = por %p55, %p56
    %p58 = scmp.ne.s32.totalorder %s47, %s48
    %p59 = scmp.eq.s32.totalorder %s27, 0
    %p60 = por %p58, %p59
    %p61 = scmp.ne.s32.totalorder %s47, %s48
    %p62 = scmp.eq.s32.totalorder %s28, 3
    %p63 = por %p61, %p62
    %p65 = scmp.ne.s32.totalorder %s48, %s64
    %p66 = scmp.eq.s32.totalorder %s28, 0
    %p67 = por %p65, %p66
    %s68 = ssub.s32 %s29, %s41
    %p69 = scmp.eq.s32.totalorder %s68, 0
    %s71 = sadd.s32 %s70, 1
    %s72 = scalar_select %p69, %s70, %s71
    %p75 = pneg %p69
    %p76 = scmp.eq.s32.totalorder %s22, 3
    %p77 = por %p75, %p76
    %p78 = scmp.ne.s32.totalorder %s70, %s73
    %p79 = scmp.eq.s32.totalorder %s22, 0
    %p80 = por %p78, %p79
    %p81 = scmp.ne.s32.totalorder %s70, %s73
    %p82 = scmp.eq.s32.totalorder %s27, 3
    %p83 = por %p81, %p82
    %p84 = scmp.ne.s32.totalorder %s73, %s74
    %p85 = scmp.eq.s32.totalorder %s27, 0
    %p86 = por %p84, %p85
    %p87 = scmp.ne.s32.totalorder %s73, %s74
    %p88 = scmp.eq.s32.totalorder %s28, 3
    %p89 = por %p87, %p88
    %p91 = scmp.ne.s32.totalorder %s74, %s90
    %p92 = scmp.eq.s32.totalorder %s28, 0
    %p93 = por %p91, %p92
    %s94 = ssub.s32 %s29, %s41
    %p95 = scmp.eq.s32.totalorder %s94, 0
    %s97 = sadd.s32 %s96, 1
    %s98 = scalar_select %p95, %s96, %s97
    %p101 = pneg %p95
    %p102 = scmp.eq.s32.totalorder %s22, 3
    %p103 = por %p101, %p102
    %p104 = scmp.ne.s32.totalorder %s96, %s99
    %p105 = scmp.eq.s32.totalorder %s22, 0
    %p106 = por %p104, %p105
    %p107 = scmp.ne.s32.totalorder %s96, %s99
    %p108 = scmp.eq.s32.totalorder %s27, 3
    %p109 = por %p107, %p108
    %p110 = scmp.ne.s32.totalorder %s99, %s100
    %p111 = scmp.eq.s32.totalorder %s27, 0
    %p112 = por %p110, %p111
    %p113 = scmp.ne.s32.totalorder %s99, %s100
    %p114 = scmp.eq.s32.totalorder %s28, 3
    %p115 = por %p113, %p114
    %p117 = scmp.ne.s32.totalorder %s100, %s116
    %p118 = scmp.eq.s32.totalorder %s28, 0
    %p119 = por %p117, %p118
    %s120 = ssub.s32 %s29, %s41
    %p121 = scmp.eq.s32.totalorder %s120, 0
    %s123 = sadd.s32 %s122, 1
    %s124 = scalar_select %p121, %s122, %s123
    %p127 = pneg %p121
    %p128 = scmp.eq.s32.totalorder %s22, 3
    %p129 = por %p127, %p128
    %p130 = scmp.ne.s32.totalorder %s122, %s125
    %p131 = scmp.eq.s32.totalorder %s22, 0
    %p132 = por %p130, %p131
    %p133 = scmp.ne.s32.totalorder %s122, %s125
    %p134 = scmp.eq.s32.totalorder %s27, 3
    %p135 = por %p133, %p134
    %p136 = scmp.ne.s32.totalorder %s125, %s126
    %p137 = scmp.eq.s32.totalorder %s27, 0
    %p138 = por %p136, %p137
    %p139 = scmp.ne.s32.totalorder %s125, %s126
    %p140 = scmp.eq.s32.totalorder %s28, 3
    %p141 = por %p139, %p140
    %p143 = scmp.ne.s32.totalorder %s126, %s142
    %p144 = scmp.eq.s32.totalorder %s28, 0
    %p145 = por %p143, %p144
    %s146 = ssub.s32 %s29, %s41
    %s147 = ssub.s32 %s30, %s37
    %s148 = sor.u32 %s146, %s147
    %p149 = scmp.eq.s32.totalorder %s148, 0
    %s151 = sadd.s32 %s150, 1
    %s152 = scalar_select %p149, %s150, %s151
    %p155 = pneg %p149
    %p156 = scmp.eq.s32.totalorder %s22, 3
    %p157 = por %p155, %p156
    %p158 = scmp.ne.s32.totalorder %s150, %s153
    %p159 = scmp.eq.s32.totalorder %s22, 0
    %p160 = por %p158, %p159
    %p161 = scmp.ne.s32.totalorder %s150, %s153
    %p162 = scmp.eq.s32.totalorder %s27, 3
    %p163 = por %p161, %p162
    %p164 = scmp.ne.s32.totalorder %s153, %s154
    %p165 = scmp.eq.s32.totalorder %s27, 0
    %p166 = por %p164, %p165
    %p167 = scmp.ne.s32.totalorder %s153, %s154
    %p168 = scmp.eq.s32.totalorder %s28, 3
    %p169 = por %p167, %p168
    %p171 = scmp.ne.s32.totalorder %s154, %s170
    %p172 = scmp.eq.s32.totalorder %s28, 0
    %p173 = por %p171, %p172
    %s174 = ssub.s32 %s29, %s41
    %s175 = ssub.s32 %s30, %s37
    %s176 = sor.u32 %s174, %s175
    %p177 = scmp.eq.s32.totalorder %s176, 0
    %s179 = sadd.s32 %s178, 1
    %s180 = scalar_select %p177, %s178, %s179
    %p183 = pneg %p177
    %p184 = scmp.eq.s32.totalorder %s22, 3
    %p185 = por %p183, %p184
    %p186 = scmp.ne.s32.totalorder %s178, %s181
    %p187 = scmp.eq.s32.totalorder %s22, 0
    %p188 = por %p186, %p187
    %p189 = scmp.ne.s32.totalorder %s178, %s181
    %p190 = scmp.eq.s32.totalorder %s27, 3
    %p191 = por %p189, %p190
    %p192 = scmp.ne.s32.totalorder %s181, %s182
    %p193 = scmp.eq.s32.totalorder %s27, 0
    %p194 = por %p192, %p193
    %p195 = scmp.ne.s32.totalorder %s181, %s182
    %p196 = scmp.eq.s32.totalorder %s28, 3
    %p197 = por %p195, %p196
    %p199 = scmp.ne.s32.totalorder %s182, %s198
    %p200 = scmp.eq.s32.totalorder %s28, 0
    %p201 = por %p199, %p200
    %s202 = ssub.s32 %s29, %s41
    %s203 = ssub.s32 %s30, %s37
    %s204 = sor.u32 %s202, %s203
    %p205 = scmp.eq.s32.totalorder %s204, 0
    %s207 = sadd.s32 %s206, 1
    %s208 = scalar_select %p205, %s206, %s207
    %p211 = pneg %p205
    %p212 = scmp.eq.s32.totalorder %s22, 3
    %p213 = por %p211, %p212
    %p214 = scmp.ne.s32.totalorder %s206, %s209
    %p215 = scmp.eq.s32.totalorder %s22, 0
    %p216 = por %p214, %p215
    %p217 = scmp.ne.s32.totalorder %s206, %s209
    %p218 = scmp.eq.s32.totalorder %s27, 3
    %p219 = por %p217, %p218
    %p220 = scmp.ne.s32.totalorder %s209, %s210
    %p221 = scmp.eq.s32.totalorder %s27, 0
    %p222 = por %p220, %p221
    %p223 = scmp.ne.s32.totalorder %s209, %s210
    %p224 = scmp.eq.s32.totalorder %s28, 3
    %p225 = por %p223, %p224
    %p227 = scmp.ne.s32.totalorder %s210, %s226
    %p228 = scmp.eq.s32.totalorder %s28, 0
    %p229 = por %p227, %p228
    %s230 = ssub.s32 %s29, %s41
    %s231 = ssub.s32 %s30, %s37
    %s232 = sor.u32 %s230, %s231
    %p233 = scmp.eq.s32.totalorder %s232, 0
    %s235 = sadd.s32 %s234, 1
    %s236 = scalar_select %p233, %s234, %s235
    %p239 = pneg %p233
    %p240 = scmp.eq.s32.totalorder %s22, 3
    %p241 = por %p239, %p240
    %p242 = scmp.ne.s32.totalorder %s234, %s237
    %p243 = scmp.eq.s32.totalorder %s22, 0
    %p244 = por %p242, %p243
    %p245 = scmp.ne.s32.totalorder %s234, %s237
    %p246 = scmp.eq.s32.totalorder %s27, 3
    %p247 = por %p245, %p246
    %p248 = scmp.ne.s32.totalorder %s237, %s238
    %p249 = scmp.eq.s32.totalorder %s27, 0
    %p250 = por %p248, %p249
    %p251 = scmp.ne.s32.totalorder %s237, %s238
    %p252 = scmp.eq.s32.totalorder %s28, 3
    %p253 = por %p251, %p252
    %p255 = scmp.ne.s32.totalorder %s238, %s254
    %p256 = scmp.eq.s32.totalorder %s28, 0
    %p257 = por %p255, %p256
    %s258 = ssub.s32 %s29, %s41
    %s259 = ssub.s32 %s30, %s37
    %s260 = sor.u32 %s258, %s259
    %p261 = scmp.eq.s32.totalorder %s260, 0
    %s263 = sadd.s32 %s262, 1
    %s264 = scalar_select %p261, %s262, %s263
    %p267 = pneg %p261
    %p268 = scmp.eq.s32.totalorder %s22, 3
    %p269 = por %p267, %p268
    %p270 = scmp.ne.s32.totalorder %s262, %s265
    %p271 = scmp.eq.s32.totalorder %s22, 0
    %p272 = por %p270, %p271
    %p273 = scmp.ne.s32.totalorder %s262, %s265
    %p274 = scmp.eq.s32.totalorder %s27, 3
    %p275 = por %p273, %p274
    %p276 = scmp.ne.s32.totalorder %s265, %s266
    %p277 = scmp.eq.s32.totalorder %s27, 0
    %p278 = por %p276, %p277
    %p279 = scmp.ne.s32.totalorder %s265, %s266
    %p280 = scmp.eq.s32.totalorder %s28, 3
    %p281 = por %p279, %p280
    %p283 = scmp.ne.s32.totalorder %s266, %s282
    %p284 = scmp.eq.s32.totalorder %s28, 0
    %p285 = por %p283, %p284
    %s286 = ssub.s32 %s29, %s41
    %s287 = ssub.s32 %s30, %s37
    %s288 = sor.u32 %s286, %s287
    %p289 = scmp.eq.s32.totalorder %s288, 0
    %s291 = sadd.s32 %s290, 1
    %s292 = scalar_select %p289, %s290, %s291
    %p295 = pneg %p289
    %p296 = scmp.eq.s32.totalorder %s22, 3
    %p297 = por %p295, %p296
    %p298 = scmp.ne.s32.totalorder %s290, %s293
    %p299 = scmp.eq.s32.totalorder %s22, 0
    %p300 = por %p298, %p299
    %p301 = scmp.ne.s32.totalorder %s290, %s293
    %p302 = scmp.eq.s32.totalorder %s27, 3
    %p303 = por %p301, %p302
    %p304 = scmp.ne.s32.totalorder %s293, %s294
    %p305 = scmp.eq.s32.totalorder %s27, 0
    %p306 = por %p304, %p305
    %p307 = scmp.ne.s32.totalorder %s293, %s294
    %p308 = scmp.eq.s32.totalorder %s28, 3
    %p309 = por %p307, %p308
    %p311 = scmp.ne.s32.totalorder %s294, %s310
    %p312 = scmp.eq.s32.totalorder %s28, 0
    %p313 = por %p311, %p312
    %s314 = ssub.s32 %s29, %s41
    %s315 = ssub.s32 %s30, %s37
    %s316 = sor.u32 %s314, %s315
    %p317 = scmp.eq.s32.totalorder %s316, 0
    %s319 = sadd.s32 %s318, 1
    %s320 = scalar_select %p317, %s318, %s319
    %p323 = pneg %p317
    %p324 = scmp.eq.s32.totalorder %s22, 3
    %p325 = por %p323, %p324
    %p326 = scmp.ne.s32.totalorder %s318, %s321
    %p327 = scmp.eq.s32.totalorder %s22, 0
    %p328 = por %p326, %p327
    %p329 = scmp.ne.s32.totalorder %s318, %s321
    %p330 = scmp.eq.s32.totalorder %s27, 3
    %p331 = por %p329, %p330
    %p332 = scmp.ne.s32.totalorder %s321, %s322
    %p333 = scmp.eq.s32.totalorder %s27, 0
    %p334 = por %p332, %p333
    %p335 = scmp.ne.s32.totalorder %s321, %s322
    %p336 = scmp.eq.s32.totalorder %s28, 3
    %p337 = por %p335, %p336
    %p339 = scmp.ne.s32.totalorder %s322, %s338
    %p340 = scmp.eq.s32.totalorder %s28, 0
    %p341 = por %p339, %p340
    %s342 = ssub.s32 %s29, %s41
    %s343 = ssub.s32 %s30, %s37
    %s344 = sor.u32 %s342, %s343
    %p345 = scmp.eq.s32.totalorder %s344, 0
    %s347 = sadd.s32 %s346, 1
    %s348 = scalar_select %p345, %s346, %s347
    %p351 = pneg %p345
    %p352 = scmp.eq.s32.totalorder %s22, 3
    %p353 = por %p351, %p352
    %p354 = scmp.ne.s32.totalorder %s346, %s349
    %p355 = scmp.eq.s32.totalorder %s22, 0
    %p356 = por %p354, %p355
    %p357 = scmp.ne.s32.totalorder %s346, %s349
    %p358 = scmp.eq.s32.totalorder %s27, 3
    %p359 = por %p357, %p358
    %p360 = scmp.ne.s32.totalorder %s349, %s350
    %p361 = scmp.eq.s32.totalorder %s27, 0
    %p362 = por %p360, %p361
    %p363 = scmp.ne.s32.totalorder %s349, %s350
    %p364 = scmp.eq.s32.totalorder %s28, 3
    %p365 = por %p363, %p364
    %p367 = scmp.ne.s32.totalorder %s350, %s366
    %p368 = scmp.eq.s32.totalorder %s28, 0
    %p369 = por %p367, %p368
    %s370 = ssub.s32 %s29, %s41
    %s371 = ssub.s32 %s30, %s37
    %s372 = sor.u32 %s370, %s371
    %p373 = scmp.eq.s32.totalorder %s372, 0
    %s375 = sadd.s32 %s374, 1
    %s376 = scalar_select %p373, %s374, %s375
    %p379 = pneg %p373
    %p380 = scmp.eq.s32.totalorder %s22, 3
    %p381 = por %p379, %p380
    %p382 = scmp.ne.s32.totalorder %s374, %s377
    %p383 = scmp.eq.s32.totalorder %s22, 0
    %p384 = por %p382, %p383
    %p385 = scmp.ne.s32.totalorder %s374, %s377
    %p386 = scmp.eq.s32.totalorder %s27, 3
    %p387 = por %p385, %p386
    %p388 = scmp.ne.s32.totalorder %s377, %s378
    %p389 = scmp.eq.s32.totalorder %s27, 0
    %p390 = por %p388, %p389
    %p391 = scmp.ne.s32.totalorder %s377, %s378
    %p392 = scmp.eq.s32.totalorder %s28, 3
    %p393 = por %p391, %p392
    %p395 = scmp.ne.s32.totalorder %s378, %s394
    %p396 = scmp.eq.s32.totalorder %s28, 0
    %p397 = por %p395, %p396
    %s398 = ssub.s32 %s29, %s41
    %s399 = ssub.s32 %s30, %s37
    %s400 = sor.u32 %s398, %s399
    %p401 = scmp.eq.s32.totalorder %s400, 0
    %s403 = sadd.s32 %s402, 1
    %s404 = scalar_select %p401, %s402, %s403
    %p407 = pneg %p401
    %p408 = scmp.eq.s32.totalorder %s22, 3
    %p409 = por %p407, %p408
    %p410 = scmp.ne.s32.totalorder %s402, %s405
    %p411 = scmp.eq.s32.totalorder %s22, 0
    %p412 = por %p410, %p411
    %p413 = scmp.ne.s32.totalorder %s402, %s405
    %p414 = scmp.eq.s32.totalorder %s27, 3
    %p415 = por %p413, %p414
    %p416 = scmp.ne.s32.totalorder %s405, %s406
    %p417 = scmp.eq.s32.totalorder %s27, 0
    %p418 = por %p416, %p417
    %p419 = scmp.ne.s32.totalorder %s405, %s406
    %p420 = scmp.eq.s32.totalorder %s28, 3
    %p421 = por %p419, %p420
    %p423 = scmp.ne.s32.totalorder %s406, %s422
    %p424 = scmp.eq.s32.totalorder %s28, 0
    %p425 = por %p423, %p424
    %s426 = ssub.s32 %s29, %s41
    %s427 = ssub.s32 %s30, %s37
    %s428 = sor.u32 %s426, %s427
    %p429 = scmp.eq.s32.totalorder %s428, 0
    %s431 = sadd.s32 %s430, 1
    %s432 = scalar_select %p429, %s430, %s431
    %p435 = pneg %p429
    %p436 = scmp.eq.s32.totalorder %s22, 3
    %p437 = por %p435, %p436
    %p438 = scmp.ne.s32.totalorder %s430, %s433
    %p439 = scmp.eq.s32.totalorder %s22, 0
    %p440 = por %p438, %p439
    %p441 = scmp.ne.s32.totalorder %s430, %s433
    %p442 = scmp.eq.s32.totalorder %s27, 3
    %p443 = por %p441, %p442
    %p444 = scmp.ne.s32.totalorder %s433, %s434
    %p445 = scmp.eq.s32.totalorder %s27, 0
    %p446 = por %p444, %p445
    %p447 = scmp.ne.s32.totalorder %s433, %s434
    %p448 = scmp.eq.s32.totalorder %s28, 3
    %p449 = por %p447, %p448
    %p451 = scmp.ne.s32.totalorder %s434, %s450
    %p452 = scmp.eq.s32.totalorder %s28, 0
    %p453 = por %p451, %p452
    %s454 = ssub.s32 %s29, %s41
    %s455 = ssub.s32 %s30, %s37
    %s456 = sor.u32 %s454, %s455
    %p457 = scmp.eq.s32.totalorder %s456, 0
    %s459 = sadd.s32 %s458, 1
    %s460 = scalar_select %p457, %s458, %s459
    %p463 = pneg %p457
    %p464 = scmp.eq.s32.totalorder %s22, 3
    %p465 = por %p463, %p464
    %p466 = scmp.ne.s32.totalorder %s458, %s461
    %p467 = scmp.eq.s32.totalorder %s22, 0
    %p468 = por %p466, %p467
    %p469 = scmp.ne.s32.totalorder %s458, %s461
    %p470 = scmp.eq.s32.totalorder %s27, 3
    %p471 = por %p469, %p470
    %p472 = scmp.ne.s32.totalorder %s461, %s462
    %p473 = scmp.eq.s32.totalorder %s27, 0
    %p474 = por %p472, %p473
    %p475 = scmp.ne.s32.totalorder %s461, %s462
    %p476 = scmp.eq.s32.totalorder %s28, 3
    %p477 = por %p475, %p476
    %p479 = scmp.ne.s32.totalorder %s462, %s478
    %p480 = scmp.eq.s32.totalorder %s28, 0
    %p481 = por %p479, %p480
    %s482 = ssub.s32 %s29, %s41
    %p483 = scmp.eq.s32.totalorder %s482, 0
    %s485 = sadd.s32 %s484, 1
    %s486 = scalar_select %p483, %s484, %s485
    %p489 = pneg %p483
    %p490 = scmp.eq.s32.totalorder %s22, 3
    %p491 = por %p489, %p490
    %p492 = scmp.ne.s32.totalorder %s484, %s487
    %p493 = scmp.eq.s32.totalorder %s22, 0
    %p494 = por %p492, %p493
    %p495 = scmp.ne.s32.totalorder %s484, %s487
    %p496 = scmp.eq.s32.totalorder %s27, 3
    %p497 = por %p495, %p496
    %p498 = scmp.ne.s32.totalorder %s487, %s488
    %p499 = scmp.eq.s32.totalorder %s27, 0
    %p500 = por %p498, %p499
    %p501 = scmp.ne.s32.totalorder %s487, %s488
    %p502 = scmp.eq.s32.totalorder %s28, 3
    %p503 = por %p501, %p502
    %p505 = scmp.ne.s32.totalorder %s488, %s504
    %p506 = scmp.eq.s32.totalorder %s28, 0
    %p507 = por %p505, %p506
    %p508 = scmp.le.s32.totalorder 1, %s22
    %p509 = scmp.lt.s32.totalorder %s22, 5
    %p510 = pnand %p508, %p509
    %p511 = pneg %p510
    // Predicated region
    $region9: #{dpr_combined_forward.1} parent=5 // pred_check
      _
    $region10: #{dpr_combined_forward.1} parent=5 // pred_check_branch
      %513 = sbr.rel (%p510) target = $region12
    $region11: #{dpr_combined_forward.1} parent=5 // pred_region
      %s514 = ssub.s32 %s22, 1
    $region12: #{dpr_combined_forward.1} parent=5 // pred_fallthru
      _
    %p515 = scmp.lt.s32.totalorder %s22, 4
    // Predicated region
    $region13: #{dpr_combined_forward.1} parent=5 // pred_check
      %p516 = pneg %p515
    $region14: #{dpr_combined_forward.1} parent=5 // pred_check_branch
      %518 = sbr.rel (%p516) target = $region16
    $region15: #{dpr_combined_forward.1} parent=5 // pred_region
      // Predicated region
      $region17: #{dpr_combined_forward.1} parent=15 // pred_check
        %p519 = pneg %p54
      $region18: #{dpr_combined_forward.1} parent=15 // pred_check_branch
        %521 = sbr.rel (%p519) target = $region20
      $region19: #{dpr_combined_forward.1} parent=15 // pred_region
        %p522 = scmp.lt.s32.totalorder %s29, 1
        %s523 = scalar_select %p522, %s29, 1
        %s524 = smul.addr %s523, 2
        %s525 = smul.addr %s524, 8
        %s526 = scalar_lea.vmem %s0, %s525
      $region20: #{dpr_combined_forward.1} parent=15 // pred_fallthru
        _
      // Predicated region
      $region21: #{dpr_combined_forward.1} parent=15 // pred_check
        %p527 = pneg %p80
      $region22: #{dpr_combined_forward.1} parent=15 // pred_check_branch
        %529 = sbr.rel (%p527) target = $region24
      $region23: #{dpr_combined_forward.1} parent=15 // pred_region
        %p530 = scmp.lt.s32.totalorder %s29, 1
        %s531 = scalar_select %p530, %s29, 1
        %s532 = smul.addr %s531, 2
        %s533 = scalar_lea.vmem %s1, %s532
      $region24: #{dpr_combined_forward.1} parent=15 // pred_fallthru
        _
      // Predicated region
      $region25: #{dpr_combined_forward.1} parent=15 // pred_check
        %p534 = pneg %p106
      $region26: #{dpr_combined_forward.1} parent=15 // pred_check_branch
        %536 = sbr.rel (%p534) target = $region28
      $region27: #{dpr_combined_forward.1} parent=15 // pred_region
        %p537 = scmp.lt.s32.totalorder %s29, 1
        %s538 = scalar_select %p537, %s29, 1
        %s539 = scalar_lea.vmem %s2, %s538
      $region28: #{dpr_combined_forward.1} parent=15 // pred_fallthru
        _
      // Predicated region
      $region29: #{dpr_combined_forward.1} parent=15 // pred_check
        %p540 = pneg %p132
      $region30: #{dpr_combined_forward.1} parent=15 // pred_check_branch
        %542 = sbr.rel (%p540) target = $region32
      $region31: #{dpr_combined_forward.1} parent=15 // pred_region
        %p543 = scmp.lt.s32.totalorder %s29, 1
        %s544 = scalar_select %p543, %s29, 1
        %s545 = scalar_lea.vmem %s3, %s544
      $region32: #{dpr_combined_forward.1} parent=15 // pred_fallthru
        _
      // Predicated region
      $region33: #{dpr_combined_forward.1} parent=15 // pred_check
        %p546 = pneg %p160
      $region34: #{dpr_combined_forward.1} parent=15 // pred_check_branch
        %548 = sbr.rel (%p546) target = $region36
      $region35: #{dpr_combined_forward.1} parent=15 // pred_region
        %p549 = scmp.lt.s32.totalorder %s29, 1
        %s550 = scalar_select %p549, %s29, 1
        %p551 = scmp.lt.s32.totalorder %s30, 1
        %s552 = scalar_select %p551, %s30, 1
        %s553 = smul.addr %s552, 4
        %s554 = smul.addr %s550, 8
        %s555 = sadd.s32 %s553, %s554
        %s556 = smul.addr %s555, 4
        %s557 = scalar_lea.vmem %s4, %s556
      $region36: #{dpr_combined_forward.1} parent=15 // pred_fallthru
        _
      // Predicated region
      $region37: #{dpr_combined_forward.1} parent=15 // pred_check
        %p558 = pneg %p188
      $region38: #{dpr_combined_forward.1} parent=15 // pred_check_branch
        %560 = sbr.rel (%p558) target = $region40
      $region39: #{dpr_combined_forward.1} parent=15 // pred_region
        %p561 = scmp.lt.s32.totalorder %s29, 1
        %s562 = scalar_select %p561, %s29, 1
        %p563 = scmp.lt.s32.totalorder %s30, 1
        %s564 = scalar_select %p563, %s30, 1
        %s565 = smul.addr %s562, 2
        %s566 = sadd.s32 %s564, %s565
        %s567 = scalar_lea.vmem %s5, %s566
      $region40: #{dpr_combined_forward.1} parent=15 // pred_fallthru
        _
      // Predicated region
      $region41: #{dpr_combined_forward.1} parent=15 // pred_check
        %p568 = pneg %p216
      $region42: #{dpr_combined_forward.1} parent=15 // pred_check_branch
        %570 = sbr.rel (%p568) target = $region44
      $region43: #{dpr_combined_forward.1} parent=15 // pred_region
        %p571 = scmp.lt.s32.totalorder %s29, 1
        %s572 = scalar_select %p571, %s29, 1
        %p573 = scmp.lt.s32.totalorder %s30, 1
        %s574 = scalar_select %p573, %s30, 1
        %s575 = smul.addr %s574, 4
        %s576 = smul.addr %s572, 8
        %s577 = sadd.s32 %s575, %s576
        %s578 = smul.addr %s577, 4
        %s579 = scalar_lea.vmem %s6, %s578
      $region44: #{dpr_combined_forward.1} parent=15 // pred_fallthru
        _
      // Predicated region
      $region45: #{dpr_combined_forward.1} parent=15 // pred_check
        %p580 = pneg %p244
      $region46: #{dpr_combined_forward.1} parent=15 // pred_check_branch
        %582 = sbr.rel (%p580) target = $region48
      $region47: #{dpr_combined_forward.1} parent=15 // pred_region
        %p583 = scmp.lt.s32.totalorder %s29, 1
        %s584 = scalar_select %p583, %s29, 1
        %p585 = scmp.lt.s32.totalorder %s30, 1
        %s586 = scalar_select %p585, %s30, 1
        %s587 = smul.addr %s584, 2
        %s588 = sadd.s32 %s586, %s587
        %s589 = scalar_lea.vmem %s7, %s588
      $region48: #{dpr_combined_forward.1} parent=15 // pred_fallthru
        _
      // Predicated region
      $region49: #{dpr_combined_forward.1} parent=15 // pred_check
        %p590 = pneg %p272
      $region50: #{dpr_combined_forward.1} parent=15 // pred_check_branch
        %592 = sbr.rel (%p590) target = $region52
      $region51: #{dpr_combined_forward.1} parent=15 // pred_region
        %p593 = scmp.lt.s32.totalorder %s29, 1
        %s594 = scalar_select %p593, %s29, 1
        %p595 = scmp.lt.s32.totalorder %s30, 1
        %s596 = scalar_select %p595, %s30, 1
        %s597 = smul.addr %s594, 2
        %s598 = sadd.s32 %s596, %s597
        %s599 = scalar_lea.vmem %s8, %s598
      $region52: #{dpr_combined_forward.1} parent=15 // pred_fallthru
        _
      // Predicated region
      $region53: #{dpr_combined_forward.1} parent=15 // pred_check
        %p600 = pneg %p300
      $region54: #{dpr_combined_forward.1} parent=15 // pred_check_branch
        %602 = sbr.rel (%p600) target = $region56
      $region55: #{dpr_combined_forward.1} parent=15 // pred_region
        %p603 = scmp.lt.s32.totalorder %s29, 1
        %s604 = scalar_select %p603, %s29, 1
        %p605 = scmp.lt.s32.totalorder %s30, 1
        %s606 = scalar_select %p605, %s30, 1
        %s607 = smul.addr %s604, 2
        %s608 = sadd.s32 %s606, %s607
        %s609 = scalar_lea.vmem %s9, %s608
      $region56: #{dpr_combined_forward.1} parent=15 // pred_fallthru
        _
      // Predicated region
      $region57: #{dpr_combined_forward.1} parent=15 // pred_check
        %p610 = pneg %p328
      $region58: #{dpr_combined_forward.1} parent=15 // pred_check_branch
        %612 = sbr.rel (%p610) target = $region60
      $region59: #{dpr_combined_forward.1} parent=15 // pred_region
        %p613 = scmp.lt.s32.totalorder %s29, 1
        %s614 = scalar_select %p613, %s29, 1
        %p615 = scmp.lt.s32.totalorder %s30, 1
        %s616 = scalar_select %p615, %s30, 1
        %s617 = smul.addr %s616, 4
        %s618 = smul.addr %s614, 8
        %s619 = sadd.s32 %s617, %s618
        %s620 = smul.addr %s619, 4
        %s621 = scalar_lea.vmem %s10, %s620
      $region60: #{dpr_combined_forward.1} parent=15 // pred_fallthru
        _
      // Predicated region
      $region61: #{dpr_combined_forward.1} parent=15 // pred_check
        %p622 = pneg %p356
      $region62: #{dpr_combined_forward.1} parent=15 // pred_check_branch
        %624 = sbr.rel (%p622) target = $region64
      $region63: #{dpr_combined_forward.1} parent=15 // pred_region
        %p625 = scmp.lt.s32.totalorder %s29, 1
        %s626 = scalar_select %p625, %s29, 1
        %p627 = scmp.lt.s32.totalorder %s30, 1
        %s628 = scalar_select %p627, %s30, 1
        %s629 = smul.addr %s626, 2
        %s630 = sadd.s32 %s628, %s629
        %s631 = scalar_lea.vmem %s11, %s630
      $region64: #{dpr_combined_forward.1} parent=15 // pred_fallthru
        _
      // Predicated region
      $region65: #{dpr_combined_forward.1} parent=15 // pred_check
        %p632 = pneg %p384
      $region66: #{dpr_combined_forward.1} parent=15 // pred_check_branch
        %634 = sbr.rel (%p632) target = $region68
      $region67: #{dpr_combined_forward.1} parent=15 // pred_region
        %p635 = scmp.lt.s32.totalorder %s29, 1
        %s636 = scalar_select %p635, %s29, 1
        %p637 = scmp.lt.s32.totalorder %s30, 1
        %s638 = scalar_select %p637, %s30, 1
        %s639 = smul.addr %s638, 8
        %s640 = smul.addr %s636, 16
        %s641 = sadd.s32 %s639, %s640
        %s642 = smul.addr %s641, 4
        %s643 = scalar_lea.vmem %s12, %s642
      $region68: #{dpr_combined_forward.1} parent=15 // pred_fallthru
        _
      // Predicated region
      $region69: #{dpr_combined_forward.1} parent=15 // pred_check
        %p644 = pneg %p412
      $region70: #{dpr_combined_forward.1} parent=15 // pred_check_branch
        %646 = sbr.rel (%p644) target = $region72
      $region71: #{dpr_combined_forward.1} parent=15 // pred_region
        %p647 = scmp.lt.s32.totalorder %s29, 1
        %s648 = scalar_select %p647, %s29, 1
        %p649 = scmp.lt.s32.totalorder %s30, 1
        %s650 = scalar_select %p649, %s30, 1
        %s651 = smul.addr %s648, 2
        %s652 = sadd.s32 %s650, %s651
        %s653 = scalar_lea.vmem %s13, %s652
      $region72: #{dpr_combined_forward.1} parent=15 // pred_fallthru
        _
      // Predicated region
      $region73: #{dpr_combined_forward.1} parent=15 // pred_check
        %p654 = pneg %p440
      $region74: #{dpr_combined_forward.1} parent=15 // pred_check_branch
        %656 = sbr.rel (%p654) target = $region76
      $region75: #{dpr_combined_forward.1} parent=15 // pred_region
        %p657 = scmp.lt.s32.totalorder %s29, 1
        %s658 = scalar_select %p657, %s29, 1
        %p659 = scmp.lt.s32.totalorder %s30, 1
        %s660 = scalar_select %p659, %s30, 1
        %s661 = smul.addr %s658, 2
        %s662 = sadd.s32 %s660, %s661
        %s663 = scalar_lea.vmem %s14, %s662
      $region76: #{dpr_combined_forward.1} parent=15 // pred_fallthru
        _
      // Predicated region
      $region77: #{dpr_combined_forward.1} parent=15 // pred_check
        %p664 = pneg %p468
      $region78: #{dpr_combined_forward.1} parent=15 // pred_check_branch
        %666 = sbr.rel (%p664) target = $region80
      $region79: #{dpr_combined_forward.1} parent=15 // pred_region
        %p667 = scmp.lt.s32.totalorder %s29, 1
        %s668 = scalar_select %p667, %s29, 1
        %p669 = scmp.lt.s32.totalorder %s30, 1
        %s670 = scalar_select %p669, %s30, 1
        %s671 = smul.addr %s668, 2
        %s672 = sadd.s32 %s670, %s671
        %s673 = scalar_lea.vmem %s15, %s672
      $region80: #{dpr_combined_forward.1} parent=15 // pred_fallthru
        _
    $region16: #{dpr_combined_forward.1} parent=5 // pred_fallthru
      _
    %p674 = scmp.le.s32.totalorder 1, %s22
    %p675 = scmp.lt.s32.totalorder %s22, 5
    %p676 = pnand %p674, %p675
    %p677 = pneg %p676
    // Predicated region
    $region81: #{dpr_combined_forward.1} parent=5 // pred_check
      _
    $region82: #{dpr_combined_forward.1} parent=5 // pred_check_branch
      %679 = sbr.rel (%p676) target = $region84
    $region83: #{dpr_combined_forward.1} parent=5 // pred_region
      %s680 = ssub.s32 %s22, 1
      %p681 = scmp.lt.s32.totalorder %s31, 1
      %s682 = scalar_select %p681, %s31, 1
      %s683 = smul.addr %s682, 2
      %s684 = smul.addr %s683, 8
      %s685 = scalar_lea.vmem %s0, %s684
      %p686 = pneg %p60
      %p687 = pneg %p57
      %p688 = scmp.lt.s32.totalorder %s31, 1
      %s689 = scalar_select %p688, %s31, 1
      %s690 = smul.addr %s689, 2
      %s691 = scalar_lea.vmem %s1, %s690
      %p692 = pneg %p86
      %p693 = pneg %p83
      %p694 = scmp.lt.s32.totalorder %s31, 1
      %s695 = scalar_select %p694, %s31, 1
      %s696 = scalar_lea.vmem %s2, %s695
      %p697 = pneg %p112
      %p698 = pneg %p109
      %p699 = scmp.lt.s32.totalorder %s31, 1
      %s700 = scalar_select %p699, %s31, 1
      %s701 = scalar_lea.vmem %s3, %s700
      %p702 = pneg %p138
      %p703 = pneg %p135
      %p704 = scmp.lt.s32.totalorder %s31, 1
      %s705 = scalar_select %p704, %s31, 1
      %p706 = scmp.lt.s32.totalorder %s32, 1
      %s707 = scalar_select %p706, %s32, 1
      %s708 = smul.addr %s707, 4
      %s709 = smul.addr %s705, 8
      %s710 = sadd.s32 %s708, %s709
      %s711 = smul.addr %s710, 4
      %s712 = scalar_lea.vmem %s4, %s711
      %p713 = pneg %p166
      %p714 = pneg %p163
      %p715 = scmp.lt.s32.totalorder %s31, 1
      %s716 = scalar_select %p715, %s31, 1
      %p717 = scmp.lt.s32.totalorder %s32, 1
      %s718 = scalar_select %p717, %s32, 1
      %s719 = smul.addr %s716, 2
      %s720 = sadd.s32 %s718, %s719
      %s721 = scalar_lea.vmem %s5, %s720
      %p722 = pneg %p194
      %p723 = pneg %p191
      %p724 = scmp.lt.s32.totalorder %s31, 1
      %s725 = scalar_select %p724, %s31, 1
      %p726 = scmp.lt.s32.totalorder %s32, 1
      %s727 = scalar_select %p726, %s32, 1
      %s728 = smul.addr %s727, 4
      %s729 = smul.addr %s725, 8
      %s730 = sadd.s32 %s728, %s729
      %s731 = smul.addr %s730, 4
      %s732 = scalar_lea.vmem %s6, %s731
      %p733 = pneg %p222
      %p734 = pneg %p219
      %p735 = scmp.lt.s32.totalorder %s31, 1
      %s736 = scalar_select %p735, %s31, 1
      %p737 = scmp.lt.s32.totalorder %s32, 1
      %s738 = scalar_select %p737, %s32, 1
      %s739 = smul.addr %s736, 2
      %s740 = sadd.s32 %s738, %s739
      %s741 = scalar_lea.vmem %s7, %s740
      %p742 = pneg %p250
      %p743 = pneg %p247
      %p744 = scmp.lt.s32.totalorder %s31, 1
      %s745 = scalar_select %p744, %s31, 1
      %p746 = scmp.lt.s32.totalorder %s32, 1
      %s747 = scalar_select %p746, %s32, 1
      %s748 = smul.addr %s745, 2
      %s749 = sadd.s32 %s747, %s748
      %s750 = scalar_lea.vmem %s8, %s749
      %p751 = pneg %p278
      %p752 = pneg %p275
      %p753 = scmp.lt.s32.totalorder %s31, 1
      %s754 = scalar_select %p753, %s31, 1
      %p755 = scmp.lt.s32.totalorder %s32, 1
      %s756 = scalar_select %p755, %s32, 1
      %s757 = smul.addr %s754, 2
      %s758 = sadd.s32 %s756, %s757
      %s759 = scalar_lea.vmem %s9, %s758
      %p760 = pneg %p306
      %p761 = pneg %p303
      %p762 = scmp.lt.s32.totalorder %s31, 1
      %s763 = scalar_select %p762, %s31, 1
      %p764 = scmp.lt.s32.totalorder %s32, 1
      %s765 = scalar_select %p764, %s32, 1
      %s766 = smul.addr %s765, 4
      %s767 = smul.addr %s763, 8
      %s768 = sadd.s32 %s766, %s767
      %s769 = smul.addr %s768, 4
      %s770 = scalar_lea.vmem %s10, %s769
      %p771 = pneg %p334
      %p772 = pneg %p331
      %p773 = scmp.lt.s32.totalorder %s31, 1
      %s774 = scalar_select %p773, %s31, 1
      %p775 = scmp.lt.s32.totalorder %s32, 1
      %s776 = scalar_select %p775, %s32, 1
      %s777 = smul.addr %s774, 2
      %s778 = sadd.s32 %s776, %s777
      %s779 = scalar_lea.vmem %s11, %s778
      %p780 = pneg %p362
      %p781 = pneg %p359
      %p782 = scmp.lt.s32.totalorder %s31, 1
      %s783 = scalar_select %p782, %s31, 1
      %p784 = scmp.lt.s32.totalorder %s32, 1
      %s785 = scalar_select %p784, %s32, 1
      %s786 = smul.addr %s785, 8
      %s787 = smul.addr %s783, 16
      %s788 = sadd.s32 %s786, %s787
      %s789 = smul.addr %s788, 4
      %s790 = scalar_lea.vmem %s12, %s789
      %p791 = pneg %p390
      %p792 = pneg %p387
      %p793 = scmp.lt.s32.totalorder %s31, 1
      %s794 = scalar_select %p793, %s31, 1
      %p795 = scmp.lt.s32.totalorder %s32, 1
      %s796 = scalar_select %p795, %s32, 1
      %s797 = smul.addr %s794, 2
      %s798 = sadd.s32 %s796, %s797
      %s799 = scalar_lea.vmem %s13, %s798
      %p800 = pneg %p418
      %p801 = pneg %p415
      %p802 = scmp.lt.s32.totalorder %s31, 1
      %s803 = scalar_select %p802, %s31, 1
      %p804 = scmp.lt.s32.totalorder %s32, 1
      %s805 = scalar_select %p804, %s32, 1
      %s806 = smul.addr %s803, 2
      %s807 = sadd.s32 %s805, %s806
      %s808 = scalar_lea.vmem %s14, %s807
      %p809 = pneg %p446
      %p810 = pneg %p443
      %p811 = scmp.lt.s32.totalorder %s31, 1
      %s812 = scalar_select %p811, %s31, 1
      %p813 = scmp.lt.s32.totalorder %s32, 1
      %s814 = scalar_select %p813, %s32, 1
      %s815 = smul.addr %s812, 2
      %s816 = sadd.s32 %s814, %s815
      %s817 = scalar_lea.vmem %s15, %s816
      %p818 = pneg %p474
      %p819 = pneg %p471
      %p820 = pneg %p500
      %p821 = pneg %p497
      %p822 = scmp.lt.s32.totalorder %s31, 1
      %s823 = scalar_select %p822, %s31, 1
      %s824 = smul.addr %s823, 2
      %s825 = scalar_lea.vmem %s16, %s824
      %p826 = scmp.lt.s32.totalorder %s31, 1
      %s827 = scalar_select %p826, %s31, 1
      %s828 = smul.addr %s827, 2
      %s829 = smul.addr %s828, 8
      %s830 = scalar_lea.vmem %s0, %s829
      %p831 = scmp.lt.s32.totalorder %s31, 1
      %s832 = scalar_select %p831, %s31, 1
      %s833 = smul.addr %s832, 2
      %s834 = scalar_lea.vmem %s1, %s833
      %p835 = scmp.lt.s32.totalorder %s31, 1
      %s836 = scalar_select %p835, %s31, 1
      %s837 = scalar_lea.vmem %s2, %s836
      %p838 = scmp.lt.s32.totalorder %s31, 1
      %s839 = scalar_select %p838, %s31, 1
      %s840 = scalar_lea.vmem %s3, %s839
      %p841 = scmp.lt.s32.totalorder %s31, 1
      %s842 = scalar_select %p841, %s31, 1
      %p843 = scmp.lt.s32.totalorder %s32, 1
      %s844 = scalar_select %p843, %s32, 1
      %s845 = smul.addr %s844, 4
      %s846 = smul.addr %s842, 8
      %s847 = sadd.s32 %s845, %s846
      %s848 = smul.addr %s847, 4
      %s849 = scalar_lea.vmem %s4, %s848
      %p850 = scmp.lt.s32.totalorder %s31, 1
      %s851 = scalar_select %p850, %s31, 1
      %p852 = scmp.lt.s32.totalorder %s32, 1
      %s853 = scalar_select %p852, %s32, 1
      %s854 = smul.addr %s851, 2
      %s855 = sadd.s32 %s853, %s854
      %s856 = scalar_lea.vmem %s5, %s855
      %p857 = scmp.lt.s32.totalorder %s31, 1
      %s858 = scalar_select %p857, %s31, 1
      %p859 = scmp.lt.s32.totalorder %s32, 1
      %s860 = scalar_select %p859, %s32, 1
      %s861 = smul.addr %s860, 4
      %s862 = smul.addr %s858, 8
      %s863 = sadd.s32 %s861, %s862
      %s864 = smul.addr %s863, 4
      %s865 = scalar_lea.vmem %s6, %s864
      %p866 = scmp.lt.s32.totalorder %s31, 1
      %s867 = scalar_select %p866, %s31, 1
      %p868 = scmp.lt.s32.totalorder %s32, 1
      %s869 = scalar_select %p868, %s32, 1
      %s870 = smul.addr %s867, 2
      %s871 = sadd.s32 %s869, %s870
      %s872 = scalar_lea.vmem %s7, %s871
      %p873 = scmp.lt.s32.totalorder %s31, 1
      %s874 = scalar_select %p873, %s31, 1
      %p875 = scmp.lt.s32.totalorder %s32, 1
      %s876 = scalar_select %p875, %s32, 1
      %s877 = smul.addr %s874, 2
      %s878 = sadd.s32 %s876, %s877
      %s879 = scalar_lea.vmem %s8, %s878
      %p880 = scmp.lt.s32.totalorder %s31, 1
      %s881 = scalar_select %p880, %s31, 1
      %p882 = scmp.lt.s32.totalorder %s32, 1
      %s883 = scalar_select %p882, %s32, 1
      %s884 = smul.addr %s881, 2
      %s885 = sadd.s32 %s883, %s884
      %s886 = scalar_lea.vmem %s9, %s885
      %p887 = scmp.lt.s32.totalorder %s31, 1
      %s888 = scalar_select %p887, %s31, 1
      %p889 = scmp.lt.s32.totalorder %s32, 1
      %s890 = scalar_select %p889, %s32, 1
      %s891 = smul.addr %s890, 4
      %s892 = smul.addr %s888, 8
      %s893 = sadd.s32 %s891, %s892
      %s894 = smul.addr %s893, 4
      %s895 = scalar_lea.vmem %s10, %s894
      %p896 = scmp.lt.s32.totalorder %s31, 1
      %s897 = scalar_select %p896, %s31, 1
      %p898 = scmp.lt.s32.totalorder %s32, 1
      %s899 = scalar_select %p898, %s32, 1
      %s900 = smul.addr %s897, 2
      %s901 = sadd.s32 %s899, %s900
      %s902 = scalar_lea.vmem %s11, %s901
      %p903 = scmp.lt.s32.totalorder %s31, 1
      %s904 = scalar_select %p903, %s31, 1
      %p905 = scmp.lt.s32.totalorder %s32, 1
      %s906 = scalar_select %p905, %s32, 1
      %s907 = smul.addr %s906, 8
      %s908 = smul.addr %s904, 16
      %s909 = sadd.s32 %s907, %s908
      %s910 = smul.addr %s909, 4
      %s911 = scalar_lea.vmem %s12, %s910
      %p912 = scmp.lt.s32.totalorder %s31, 1
      %s913 = scalar_select %p912, %s31, 1
      %p914 = scmp.lt.s32.totalorder %s32, 1
      %s915 = scalar_select %p914, %s32, 1
      %s916 = smul.addr %s913, 2
      %s917 = sadd.s32 %s915, %s916
      %s918 = scalar_lea.vmem %s13, %s917
      %p919 = scmp.lt.s32.totalorder %s31, 1
      %s920 = scalar_select %p919, %s31, 1
      %p921 = scmp.lt.s32.totalorder %s32, 1
      %s922 = scalar_select %p921, %s32, 1
      %s923 = smul.addr %s920, 2
      %s924 = sadd.s32 %s922, %s923
      %s925 = scalar_lea.vmem %s14, %s924
      %p926 = scmp.lt.s32.totalorder %s31, 1
      %s927 = scalar_select %p926, %s31, 1
      %p928 = scmp.lt.s32.totalorder %s32, 1
      %s929 = scalar_select %p928, %s32, 1
      %s930 = smul.addr %s927, 2
      %s931 = sadd.s32 %s929, %s930
      %s932 = scalar_lea.vmem %s15, %s931
      %p933 = scmp.lt.s32.totalorder %s31, 1
      %s934 = scalar_select %p933, %s31, 1
      %s935 = smul.addr %s934, 2
      %s936 = scalar_lea.vmem %s16, %s935
      %p938 = scmp.eq.s32.totalorder %s32, 0
      // Predicated region
      $region85: #{dpr_combined_forward.1} parent=83 // pred_check
        %p939 = pneg %p938
      $region86: #{dpr_combined_forward.1} parent=83 // pred_check_branch
        %941 = sbr.rel (%p939) target = $region88
      $region87: #{dpr_combined_forward.1} parent=83 // pred_region
        %v942 = vld [vmem:[%s830] sm:$0xff]
        %v943 = vld [vmem:[%s830 + $0x8] sm:$0xff]
        %v944 = vld [vmem:[%s837] sm:$0x1]
        %v945 = vld [vmem:[%s840] sm:$0x1]
        %vm946 = vcmask 261120
        %v947 = vsel %vm946, %v942, 0.0
        %948 = vadd.xlane.f32.xlu0 %v947
        %v949 = vpop.xlane.xlu0 %948
        %v950 = vsel %vm946, %v943, 0.0
        %951 = vadd.xlane.f32.xlu0 %v950
        %v952 = vpop.xlane.xlu0 %951
        %v953 = vrcp.pop 32.0
        %v954 = vmul.f32 %v949, %v953
        %v955 = vmul.f32 %v952, %v953
        %v956 = vsub.f32 %v942, %v954
        %v957 = vsub.f32 %v943, %v955
        %v958 = vmul.f32 %v956, %v956
        %v959 = vmul.f32 %v957, %v957
        %v960 = vsel %vm946, %v958, 0.0
        %961 = vadd.xlane.f32.xlu0 %v960
        %v962 = vpop.xlane.xlu0 %961
        %v963 = vsel %vm946, %v959, 0.0
        %964 = vadd.xlane.f32.xlu0 %v963
        %v965 = vpop.xlane.xlu0 %964
        %v966 = vmul.f32 %v962, %v953
        %v967 = vmul.f32 %v965, %v953
        %v968 = vadd.f32 %v966, 1e-12
        %v969 = vadd.f32 %v967, 1e-12
        %v970 = vrsqrt.pop %v968
        %v971 = vrsqrt.pop %v969
        %v972 = vmul.f32 %v956, %v970
        %v973 = vmul.f32 %v957, %v971
        %v975 = vlaneseq
        %v976 = vshrl.u32 %v975, 7
        %v977 = vsub.s32 0, %v976
        %v978 = vrot.slane %v944, %v977
        %v980 = vmul.f32 %v972, %v978
        %v981 = vmul.f32 %v973, %v978
        %v983 = vlaneseq
        %v984 = vshrl.u32 %v983, 7
        %v985 = vsub.s32 0, %v984
        %v986 = vrot.slane %v945, %v985
        %v988 = vadd.f32 %v980, %v986
        %v989 = vadd.f32 %v981, %v986
        %990 = vst.msk [vmem:[#allocation2] sm:$0xff] %vm946, %v988
        %991 = vst.msk [vmem:[#allocation2 + $0x8] sm:$0xff] %vm946, %v989
        %v992 = vld [vmem:[%s834] sm:$0x3]
        %v993 = vsub.f32 1.0, %v992
        %v994 = vmul.f32 %v993, -1e+09
        %vm995 = vcmask 58368
        %996 = vst.msk [vmem:[#allocation3] sm:$0x3] %vm995, %v994
      $region88: #{dpr_combined_forward.1} parent=83 // pred_fallthru
        _
      %v997 = vld [vmem:[#allocation2] sm:$0xff]
      %v998 = vld [vmem:[#allocation2 + $0x8] sm:$0xff]
      %v999 = vpack.c.bf16 %v998, %v997
      %v1000 = vld [vmem:[%s849] sm:$0xf]
      %v1001 = vld [vmem:[%s849 + $0x4] sm:$0xf]
      %v1002 = vld [vmem:[%s849 + $0x8] sm:$0xf]
      %v1003 = vld [vmem:[%s849 + $0xc] sm:$0xf]
      %v1004 = vld [vmem:[%s856] sm:$0x1]
      %v1006 = vlaneseq
      %v1007 = vshrl.u32 %v1006, 7
      %v1008 = vsub.s32 0, %v1007
      %v1009 = vrot.slane %v1004, %v1008
      %v1015 = vunpack.c.l.b16 %v1000
      %v1016 = vunpack.c.l.b16 %v1001
      %v1017 = vunpack.c.l.b16 %v1002
      %v1018 = vunpack.c.l.b16 %v1003
      %v1019 = vpack.c.b16 %v1016, %v1015
      %v1020 = vpack.c.b16 %v1018, %v1017
      %vm1023 = vcmask 261120
      %v1025 = vsel %vm1023, %v999, 0
      %1027 = vmatprep.subr.bf16.mxu0 0
      %1028 = vmatpush1.bf16.msra.mxu0 %v1019
      %1029 = vmatprep.subr.bf16.mxu0 0
      %1030 = vmatpush1.bf16.msra.mxu0 %v1020
      %1031 = vmatprep.subr.bf16.mxu0 0
      %1032 = vmatpush1.bf16.msra.mxu0 0
      %1033 = vmatprep.subr.bf16.mxu0 0
      %1034 = vmatpush1.bf16.msra.mxu0 0
      %1035 = vmatprep.subr.bf16.mxu0 0
      %1036 = vmatpush1.bf16.msra.mxu0 0
      %1037 = vmatprep.subr.bf16.mxu0 0
      %1038 = vmatpush1.bf16.msra.mxu0 0
      %1039 = vmatprep.subr.bf16.mxu0 0
      %1040 = vmatpush1.bf16.msra.mxu0 0
      %1041 = vmatprep.subr.bf16.mxu0 0
      %1042 = vmatpush1.bf16.msra.mxu0 0
      %1043 = vmatprep.subr.bf16.mxu0 0
      %1044 = vmatpush1.bf16.msra.mxu0 0
      %1045 = vmatprep.subr.bf16.mxu0 0
      %1046 = vmatpush1.bf16.msra.mxu0 0
      %1047 = vmatprep.subr.bf16.mxu0 0
      %1048 = vmatpush1.bf16.msra.mxu0 0
      %1049 = vmatprep.subr.bf16.mxu0 0
      %1050 = vmatpush1.bf16.msra.mxu0 0
      %1051 = vmatprep.subr.bf16.mxu0 0
      %1052 = vmatpush1.bf16.msra.mxu0 0
      %1053 = vmatprep.subr.bf16.mxu0 0
      %1054 = vmatpush1.bf16.msra.mxu0 0
      %1055 = vmatprep.subr.bf16.mxu0 0
      %1056 = vmatpush1.bf16.msra.mxu0 0
      %1057 = vmatprep.subr.bf16.mxu0 0
      %1058 = vmatpush1.bf16.msra.mxu0 0
      %1059 = vmatprep.mubr.bf16.mxu0 0
      %1060 = vmatmul.mubr.bf16.gmra.mrb[0].mxu0 %v1025
      %v1061 = vpop.f32.mrb[0].mxu0
      %v1062 = vadd.f32 %v1009, %v1061
      %v1063 = vpop.f32.mrb[0].mxu0
      %v1064 = vpop.f32.mrb[0].mxu0
      %v1065 = vadd.f32 %v1009, %v1064
      %v1066 = vpop.f32.mrb[0].mxu0
      %1067 = vdwg.mxu0
      %v1068 = vld [vmem:[#allocation3] sm:$0x3]
      %v1071 = vunpack.c.l.s4 1966171168
      %v1072 = vunpack.c.0.s8 %v1071
      %v1073 = vlaneseq
      %v1074 = vshrl.u32 %v1073, 7
      %v1075 = vsub.s32 %v1072, %v1074
      %v1076 = vrot.slane %v1068, %v1075
      %v1077 = vcombine.high %v1076, %v1076
      %v1079 = vunpack.c.l.s4 1966171168
      %v1080 = vunpack.c.0.s8 %v1079
      %v1081 = vlaneseq
      %v1082 = vshrl.u32 %v1081, 7
      %v1083 = vsub.s32 %v1080, %v1082
      %v1084 = vrot.slane %v1076, %v1083
      %v1086 = vunpack.c.l.s4 1966171168
      %v1087 = vunpack.c.0.s8 %v1086
      %v1088 = vlaneseq
      %v1089 = vshrl.u32 %v1088, 7
      %v1090 = vsub.s32 %v1087, %v1089
      %v1091 = vrot.slane %v1077, %v1090
      %1093 = vrot.lane.b32.xlu0 %v1062, 96
      %v1094 = vpop.permute.xlu0 %1093
      %vm1095 = vcmask 130048
      %v1096 = vsel %vm1095, %v1062, 0
      %v1098 = vsel %vm1095, %v1094, 0
      %1100 = vmatprep.subr.mxu0 0.0
      %1101 = vmatpush1.xpose.msra.mxu0 %v1098
      %1102 = vmatprep.subr.mxu0 0.0
      %1103 = vmatpush1.xpose.msra.mxu0 0.0
      %1104 = vmatprep.subr.mxu0 0.0
      %1105 = vmatpush1.xpose.msra.mxu0 0.0
      %1106 = vmatprep.subr.mxu0 0.0
      %1107 = vmatpush1.xpose.msra.mxu0 0.0
      %1108 = vmatprep.subr.mxu0 0.0
      %1109 = vmatpush1.xpose.msra.mxu0 0.0
      %1110 = vmatprep.subr.mxu0 0.0
      %1111 = vmatpush1.xpose.msra.mxu0 0.0
      %1112 = vmatprep.subr.mxu0 0.0
      %1113 = vmatpush1.xpose.msra.mxu0 0.0
      %1114 = vmatprep.subr.mxu0 0.0
      %1115 = vmatpush1.xpose.msra.mxu0 0.0
      %1116 = vmatprep.subr.mxu0 0.0
      %1117 = vmatpush1.xpose.msra.mxu0 0.0
      %1118 = vmatprep.subr.mxu0 0.0
      %1119 = vmatpush1.xpose.msra.mxu0 0.0
      %1120 = vmatprep.subr.mxu0 0.0
      %1121 = vmatpush1.xpose.msra.mxu0 0.0
      %1122 = vmatprep.subr.mxu0 0.0
      %1123 = vmatpush1.xpose.msra.mxu0 0.0
      %1124 = vmatprep.subr.mxu0 0.0
      %1125 = vmatpush1.xpose.msra.mxu0 0.0
      %1126 = vmatprep.subr.mxu0 0.0
      %1127 = vmatpush1.xpose.msra.mxu0 0.0
      %1128 = vmatprep.subr.mxu0 0.0
      %1129 = vmatpush1.xpose.msra.mxu0 0.0
      %1130 = vmatprep.subr.mxu0 0.0
      %1131 = vmatpush1.xpose.msra.mxu0 0.0
      %1132 = vmatprep.subr.mxu0 0.0
      %1133 = vmatpush1.xpose.msra.mxu0 0.0
      %1134 = vmatprep.subr.mxu0 0.0
      %1135 = vmatpush1.xpose.msra.mxu0 0.0
      %1136 = vmatprep.subr.mxu0 0.0
      %1137 = vmatpush1.xpose.msra.mxu0 0.0
      %1138 = vmatprep.subr.mxu0 0.0
      %1139 = vmatpush1.xpose.msra.mxu0 0.0
      %1140 = vmatprep.subr.mxu0 0.0
      %1141 = vmatpush1.xpose.msra.mxu0 0.0
      %1142 = vmatprep.subr.mxu0 0.0
      %1143 = vmatpush1.xpose.msra.mxu0 0.0
      %1144 = vmatprep.subr.mxu0 0.0
      %1145 = vmatpush1.xpose.msra.mxu0 0.0
      %1146 = vmatprep.subr.mxu0 0.0
      %1147 = vmatpush1.xpose.msra.mxu0 0.0
      %1148 = vmatprep.subr.mxu0 0.0
      %1149 = vmatpush1.xpose.msra.mxu0 0.0
      %1150 = vmatprep.subr.mxu0 0.0
      %1151 = vmatpush1.xpose.msra.mxu0 0.0
      %1152 = vmatprep.subr.mxu0 0.0
      %1153 = vmatpush1.xpose.msra.mxu0 0.0
      %1154 = vmatprep.subr.mxu0 0.0
      %1155 = vmatpush1.xpose.msra.mxu0 0.0
      %1156 = vmatprep.subr.mxu0 0.0
      %1157 = vmatpush1.xpose.msra.mxu0 0.0
      %1158 = vmatprep.subr.mxu0 0.0
      %1159 = vmatpush1.xpose.msra.mxu0 0.0
      %1160 = vmatprep.subr.mxu0 0.0
      %1161 = vmatpush1.xpose.msra.mxu0 0.0
      %1162 = vmatprep.subr.mxu0 0.0
      %1163 = vmatpush1.xpose.msra.mxu0 0.0
      %1164 = vmatprep.mubr.f32.mxu0 0.0
      %1165 = vmatmul.mubr.f32.gmra.mrb[0].mxu0 %v1096
      %v1166 = vpop.f32.mrb[0].mxu0
      %v1167 = vadd.f32 0.0, %v1166
      %v1168 = vpop.f32.mrb[0].mxu0
      %1169 = vdwg.mxu0
      %1171 = vrot.lane.b32.xlu0 %v1065, 96
      %v1172 = vpop.permute.xlu0 %1171
      %v1173 = vsel %vm1095, %v1065, 0
      %v1175 = vsel %vm1095, %v1172, 0
      %1177 = vmatprep.subr.mxu0 0.0
      %1178 = vmatpush1.xpose.msra.mxu0 %v1175
      %1179 = vmatprep.subr.mxu0 0.0
      %1180 = vmatpush1.xpose.msra.mxu0 0.0
      %1181 = vmatprep.subr.mxu0 0.0
      %1182 = vmatpush1.xpose.msra.mxu0 0.0
      %1183 = vmatprep.subr.mxu0 0.0
      %1184 = vmatpush1.xpose.msra.mxu0 0.0
      %1185 = vmatprep.subr.mxu0 0.0
      %1186 = vmatpush1.xpose.msra.mxu0 0.0
      %1187 = vmatprep.subr.mxu0 0.0
      %1188 = vmatpush1.xpose.msra.mxu0 0.0
      %1189 = vmatprep.subr.mxu0 0.0
      %1190 = vmatpush1.xpose.msra.mxu0 0.0
      %1191 = vmatprep.subr.mxu0 0.0
      %1192 = vmatpush1.xpose.msra.mxu0 0.0
      %1193 = vmatprep.subr.mxu0 0.0
      %1194 = vmatpush1.xpose.msra.mxu0 0.0
      %1195 = vmatprep.subr.mxu0 0.0
      %1196 = vmatpush1.xpose.msra.mxu0 0.0
      %1197 = vmatprep.subr.mxu0 0.0
      %1198 = vmatpush1.xpose.msra.mxu0 0.0
      %1199 = vmatprep.subr.mxu0 0.0
      %1200 = vmatpush1.xpose.msra.mxu0 0.0
      %1201 = vmatprep.subr.mxu0 0.0
      %1202 = vmatpush1.xpose.msra.mxu0 0.0
      %1203 = vmatprep.subr.mxu0 0.0
      %1204 = vmatpush1.xpose.msra.mxu0 0.0
      %1205 = vmatprep.subr.mxu0 0.0
      %1206 = vmatpush1.xpose.msra.mxu0 0.0
      %1207 = vmatprep.subr.mxu0 0.0
      %1208 = vmatpush1.xpose.msra.mxu0 0.0
      %1209 = vmatprep.subr.mxu0 0.0
      %1210 = vmatpush1.xpose.msra.mxu0 0.0
      %1211 = vmatprep.subr.mxu0 0.0
      %1212 = vmatpush1.xpose.msra.mxu0 0.0
      %1213 = vmatprep.subr.mxu0 0.0
      %1214 = vmatpush1.xpose.msra.mxu0 0.0
      %1215 = vmatprep.subr.mxu0 0.0
      %1216 = vmatpush1.xpose.msra.mxu0 0.0
      %1217 = vmatprep.subr.mxu0 0.0
      %1218 = vmatpush1.xpose.msra.mxu0 0.0
      %1219 = vmatprep.subr.mxu0 0.0
      %1220 = vmatpush1.xpose.msra.mxu0 0.0
      %1221 = vmatprep.subr.mxu0 0.0
      %1222 = vmatpush1.xpose.msra.mxu0 0.0
      %1223 = vmatprep.subr.mxu0 0.0
      %1224 = vmatpush1.xpose.msra.mxu0 0.0
      %1225 = vmatprep.subr.mxu0 0.0
      %1226 = vmatpush1.xpose.msra.mxu0 0.0
      %1227 = vmatprep.subr.mxu0 0.0
      %1228 = vmatpush1.xpose.msra.mxu0 0.0
      %1229 = vmatprep.subr.mxu0 0.0
      %1230 = vmatpush1.xpose.msra.mxu0 0.0
      %1231 = vmatprep.subr.mxu0 0.0
      %1232 = vmatpush1.xpose.msra.mxu0 0.0
      %1233 = vmatprep.subr.mxu0 0.0
      %1234 = vmatpush1.xpose.msra.mxu0 0.0
      %1235 = vmatprep.subr.mxu0 0.0
      %1236 = vmatpush1.xpose.msra.mxu0 0.0
      %1237 = vmatprep.subr.mxu0 0.0
      %1238 = vmatpush1.xpose.msra.mxu0 0.0
      %1239 = vmatprep.subr.mxu0 0.0
      %1240 = vmatpush1.xpose.msra.mxu0 0.0
      %1241 = vmatprep.mubr.f32.mxu0 0.0
      %1242 = vmatmul.mubr.f32.gmra.mrb[0].mxu0 %v1173
      %v1243 = vpop.f32.mrb[0].mxu0
      %v1244 = vadd.f32 0.0, %v1243
      %v1245 = vpop.f32.mrb[0].mxu0
      %1246 = vdwg.mxu0
      %v1247 = vmul.f32 %v1167, 0.25
      %v1248 = vmul.f32 %v1244, 0.25
      %v1249 = vlaneseq
      %v1250 = vshrl.u32 %v1249, 7
      %v1251 = vsub.s32 0, %v1250
      %v1252 = vrot.slane %v1084, %v1251
      %v1253 = vlaneseq
      %v1254 = vshrl.u32 %v1253, 7
      %v1255 = vsub.s32 0, %v1254
      %v1256 = vrot.slane %v1091, %v1255
      %v1259 = vadd.f32 %v1247, %v1252
      %v1260 = vadd.f32 %v1248, %v1256
      %vm1261 = vcmask 64512
      %v1262 = vsel %vm1261, %v1259, -inf
      %1263 = vmax.xlane.f32.xlu0 %v1262
      %v1264 = vpop.xlane.xlu0 %1263
      %v1265 = vsel %vm1261, %v1260, -inf
      %1266 = vmax.xlane.f32.xlu0 %v1265
      %v1267 = vpop.xlane.xlu0 %1266
      %v1268 = vsub.f32 %v1259, %v1264
      %v1269 = vsub.f32 %v1260, %v1267
      %v1270 = vmul.f32 %v1268, 1.442695
      %v1271 = vpow.pop %v1270
      %v1272 = vmul.f32 %v1269, 1.442695
      %v1273 = vpow.pop %v1272
      %v1274 = vsel %vm1261, %v1271, 0.0
      %1275 = vadd.xlane.f32.xlu0 %v1274
      %v1276 = vpop.xlane.xlu0 %1275
      %v1277 = vsel %vm1261, %v1273, 0.0
      %1278 = vadd.xlane.f32.xlu0 %v1277
      %v1279 = vpop.xlane.xlu0 %1278
      %v1280 = vrcp.pop %v1276
      %v1281 = vrcp.pop %v1279
      %v1282 = vmul.f32 %v1271, %v1280
      %v1283 = vmul.f32 %v1273, %v1281
      %1284 = vrot.lane.b32.xlu0 %v1062, 64
      %v1285 = vpop.permute.xlu0 %1284
      %v1288 = vsel %vm1261, %v1282, 0
      %1290 = vmatprep.subr.mxu0 0.0
      %1291 = vmatpush1.msra.mxu0 %v1285
      %1292 = vmatprep.subr.mxu0 0.0
      %1293 = vmatpush1.msra.mxu0 0.0
      %1294 = vmatprep.subr.mxu0 0.0
      %1295 = vmatpush1.msra.mxu0 0.0
      %1296 = vmatprep.subr.mxu0 0.0
      %1297 = vmatpush1.msra.mxu0 0.0
      %1298 = vmatprep.subr.mxu0 0.0
      %1299 = vmatpush1.msra.mxu0 0.0
      %1300 = vmatprep.subr.mxu0 0.0
      %1301 = vmatpush1.msra.mxu0 0.0
      %1302 = vmatprep.subr.mxu0 0.0
      %1303 = vmatpush1.msra.mxu0 0.0
      %1304 = vmatprep.subr.mxu0 0.0
      %1305 = vmatpush1.msra.mxu0 0.0
      %1306 = vmatprep.subr.mxu0 0.0
      %1307 = vmatpush1.msra.mxu0 0.0
      %1308 = vmatprep.subr.mxu0 0.0
      %1309 = vmatpush1.msra.mxu0 0.0
      %1310 = vmatprep.subr.mxu0 0.0
      %1311 = vmatpush1.msra.mxu0 0.0
      %1312 = vmatprep.subr.mxu0 0.0
      %1313 = vmatpush1.msra.mxu0 0.0
      %1314 = vmatprep.subr.mxu0 0.0
      %1315 = vmatpush1.msra.mxu0 0.0
      %1316 = vmatprep.subr.mxu0 0.0
      %1317 = vmatpush1.msra.mxu0 0.0
      %1318 = vmatprep.subr.mxu0 0.0
      %1319 = vmatpush1.msra.mxu0 0.0
      %1320 = vmatprep.subr.mxu0 0.0
      %1321 = vmatpush1.msra.mxu0 0.0
      %1322 = vmatprep.subr.mxu0 0.0
      %1323 = vmatpush1.msra.mxu0 0.0
      %1324 = vmatprep.subr.mxu0 0.0
      %1325 = vmatpush1.msra.mxu0 0.0
      %1326 = vmatprep.subr.mxu0 0.0
      %1327 = vmatpush1.msra.mxu0 0.0
      %1328 = vmatprep.subr.mxu0 0.0
      %1329 = vmatpush1.msra.mxu0 0.0
      %1330 = vmatprep.subr.mxu0 0.0
      %1331 = vmatpush1.msra.mxu0 0.0
      %1332 = vmatprep.subr.mxu0 0.0
      %1333 = vmatpush1.msra.mxu0 0.0
      %1334 = vmatprep.subr.mxu0 0.0
      %1335 = vmatpush1.msra.mxu0 0.0
      %1336 = vmatprep.subr.mxu0 0.0
      %1337 = vmatpush1.msra.mxu0 0.0
      %1338 = vmatprep.subr.mxu0 0.0
      %1339 = vmatpush1.msra.mxu0 0.0
      %1340 = vmatprep.subr.mxu0 0.0
      %1341 = vmatpush1.msra.mxu0 0.0
      %1342 = vmatprep.subr.mxu0 0.0
      %1343 = vmatpush1.msra.mxu0 0.0
      %1344 = vmatprep.subr.mxu0 0.0
      %1345 = vmatpush1.msra.mxu0 0.0
      %1346 = vmatprep.subr.mxu0 0.0
      %1347 = vmatpush1.msra.mxu0 0.0
      %1348 = vmatprep.subr.mxu0 0.0
      %1349 = vmatpush1.msra.mxu0 0.0
      %1350 = vmatprep.subr.mxu0 0.0
      %1351 = vmatpush1.msra.mxu0 0.0
      %1352 = vmatprep.subr.mxu0 0.0
      %1353 = vmatpush1.msra.mxu0 0.0
      %1354 = vmatprep.mubr.f32.mxu0 0.0
      %1355 = vmatmul.mubr.f32.gmra.mrb[0].mxu0 %v1288
      %v1356 = vpop.f32.mrb[0].mxu0
      %v1357 = vadd.f32 0.0, %v1356
      %v1358 = vpop.f32.mrb[0].mxu0
      %1359 = vdwg.mxu0
      %1360 = vrot.lane.b32.xlu0 %v1065, 64
      %v1361 = vpop.permute.xlu0 %1360
      %v1364 = vsel %vm1261, %v1283, 0
      %1366 = vmatprep.subr.mxu0 0.0
      %1367 = vmatpush1.msra.mxu0 %v1361
      %1368 = vmatprep.subr.mxu0 0.0
      %1369 = vmatpush1.msra.mxu0 0.0
      %1370 = vmatprep.subr.mxu0 0.0
      %1371 = vmatpush1.msra.mxu0 0.0
      %1372 = vmatprep.subr.mxu0 0.0
      %1373 = vmatpush1.msra.mxu0 0.0
      %1374 = vmatprep.subr.mxu0 0.0
      %1375 = vmatpush1.msra.mxu0 0.0
      %1376 = vmatprep.subr.mxu0 0.0
      %1377 = vmatpush1.msra.mxu0 0.0
      %1378 = vmatprep.subr.mxu0 0.0
      %1379 = vmatpush1.msra.mxu0 0.0
      %1380 = vmatprep.subr.mxu0 0.0
      %1381 = vmatpush1.msra.mxu0 0.0
      %1382 = vmatprep.subr.mxu0 0.0
      %1383 = vmatpush1.msra.mxu0 0.0
      %1384 = vmatprep.subr.mxu0 0.0
      %1385 = vmatpush1.msra.mxu0 0.0
      %1386 = vmatprep.subr.mxu0 0.0
      %1387 = vmatpush1.msra.mxu0 0.0
      %1388 = vmatprep.subr.mxu0 0.0
      %1389 = vmatpush1.msra.mxu0 0.0
      %1390 = vmatprep.subr.mxu0 0.0
      %1391 = vmatpush1.msra.mxu0 0.0
      %1392 = vmatprep.subr.mxu0 0.0
      %1393 = vmatpush1.msra.mxu0 0.0
      %1394 = vmatprep.subr.mxu0 0.0
      %1395 = vmatpush1.msra.mxu0 0.0
      %1396 = vmatprep.subr.mxu0 0.0
      %1397 = vmatpush1.msra.mxu0 0.0
      %1398 = vmatprep.subr.mxu0 0.0
      %1399 = vmatpush1.msra.mxu0 0.0
      %1400 = vmatprep.subr.mxu0 0.0
      %1401 = vmatpush1.msra.mxu0 0.0
      %1402 = vmatprep.subr.mxu0 0.0
      %1403 = vmatpush1.msra.mxu0 0.0
      %1404 = vmatprep.subr.mxu0 0.0
      %1405 = vmatpush1.msra.mxu0 0.0
      %1406 = vmatprep.subr.mxu0 0.0
      %1407 = vmatpush1.msra.mxu0 0.0
      %1408 = vmatprep.subr.mxu0 0.0
      %1409 = vmatpush1.msra.mxu0 0.0
      %1410 = vmatprep.subr.mxu0 0.0
      %1411 = vmatpush1.msra.mxu0 0.0
      %1412 = vmatprep.subr.mxu0 0.0
      %1413 = vmatpush1.msra.mxu0 0.0
      %1414 = vmatprep.subr.mxu0 0.0
      %1415 = vmatpush1.msra.mxu0 0.0
      %1416 = vmatprep.subr.mxu0 0.0
      %1417 = vmatpush1.msra.mxu0 0.0
      %1418 = vmatprep.subr.mxu0 0.0
      %1419 = vmatpush1.msra.mxu0 0.0
      %1420 = vmatprep.subr.mxu0 0.0
      %1421 = vmatpush1.msra.mxu0 0.0
      %1422 = vmatprep.subr.mxu0 0.0
      %1423 = vmatpush1.msra.mxu0 0.0
      %1424 = vmatprep.subr.mxu0 0.0
      %1425 = vmatpush1.msra.mxu0 0.0
      %1426 = vmatprep.subr.mxu0 0.0
      %1427 = vmatpush1.msra.mxu0 0.0
      %1428 = vmatprep.subr.mxu0 0.0
      %1429 = vmatpush1.msra.mxu0 0.0
      %1430 = vmatprep.mubr.f32.mxu0 0.0
      %1431 = vmatmul.mubr.f32.gmra.mrb[0].mxu0 %v1364
      %v1432 = vpop.f32.mrb[0].mxu0
      %v1433 = vadd.f32 0.0, %v1432
      %v1434 = vpop.f32.mrb[0].mxu0
      %1435 = vdwg.mxu0
      %1436 = vrot.lane.b32.xlu0 %v1062, 112
      %v1437 = vpop.permute.xlu0 %1436
      %1438 = vrot.lane.b32.xlu0 %v1062, 80
      %v1439 = vpop.permute.xlu0 %1438
      %v1440 = vsel %vm1095, %v1437, 0
      %v1442 = vsel %vm1095, %v1439, 0
      %1444 = vmatprep.subr.mxu0 0.0
      %1445 = vmatpush1.xpose.msra.mxu0 %v1442
      %1446 = vmatprep.subr.mxu0 0.0
      %1447 = vmatpush1.xpose.msra.mxu0 0.0
      %1448 = vmatprep.subr.mxu0 0.0
      %1449 = vmatpush1.xpose.msra.mxu0 0.0
      %1450 = vmatprep.subr.mxu0 0.0
      %1451 = vmatpush1.xpose.msra.mxu0 0.0
      %1452 = vmatprep.subr.mxu0 0.0
      %1453 = vmatpush1.xpose.msra.mxu0 0.0
      %1454 = vmatprep.subr.mxu0 0.0
      %1455 = vmatpush1.xpose.msra.mxu0 0.0
      %1456 = vmatprep.subr.mxu0 0.0
      %1457 = vmatpush1.xpose.msra.mxu0 0.0
      %1458 = vmatprep.subr.mxu0 0.0
      %1459 = vmatpush1.xpose.msra.mxu0 0.0
      %1460 = vmatprep.subr.mxu0 0.0
      %1461 = vmatpush1.xpose.msra.mxu0 0.0
      %1462 = vmatprep.subr.mxu0 0.0
      %1463 = vmatpush1.xpose.msra.mxu0 0.0
      %1464 = vmatprep.subr.mxu0 0.0
      %1465 = vmatpush1.xpose.msra.mxu0 0.0
      %1466 = vmatprep.subr.mxu0 0.0
      %1467 = vmatpush1.xpose.msra.mxu0 0.0
      %1468 = vmatprep.subr.mxu0 0.0
      %1469 = vmatpush1.xpose.msra.mxu0 0.0
      %1470 = vmatprep.subr.mxu0 0.0
      %1471 = vmatpush1.xpose.msra.mxu0 0.0
      %1472 = vmatprep.subr.mxu0 0.0
      %1473 = vmatpush1.xpose.msra.mxu0 0.0
      %1474 = vmatprep.subr.mxu0 0.0
      %1475 = vmatpush1.xpose.msra.mxu0 0.0
      %1476 = vmatprep.subr.mxu0 0.0
      %1477 = vmatpush1.xpose.msra.mxu0 0.0
      %1478 = vmatprep.subr.mxu0 0.0
      %1479 = vmatpush1.xpose.msra.mxu0 0.0
      %1480 = vmatprep.subr.mxu0 0.0
      %1481 = vmatpush1.xpose.msra.mxu0 0.0
      %1482 = vmatprep.subr.mxu0 0.0
      %1483 = vmatpush1.xpose.msra.mxu0 0.0
      %1484 = vmatprep.subr.mxu0 0.0
      %1485 = vmatpush1.xpose.msra.mxu0 0.0
      %1486 = vmatprep.subr.mxu0 0.0
      %1487 = vmatpush1.xpose.msra.mxu0 0.0
      %1488 = vmatprep.subr.mxu0 0.0
      %1489 = vmatpush1.xpose.msra.mxu0 0.0
      %1490 = vmatprep.subr.mxu0 0.0
      %1491 = vmatpush1.xpose.msra.mxu0 0.0
      %1492 = vmatprep.subr.mxu0 0.0
      %1493 = vmatpush1.xpose.msra.mxu0 0.0
      %1494 = vmatprep.subr.mxu0 0.0
      %1495 = vmatpush1.xpose.msra.mxu0 0.0
      %1496 = vmatprep.subr.mxu0 0.0
      %1497 = vmatpush1.xpose.msra.mxu0 0.0
      %1498 = vmatprep.subr.mxu0 0.0
      %1499 = vmatpush1.xpose.msra.mxu0 0.0
      %1500 = vmatprep.subr.mxu0 0.0
      %1501 = vmatpush1.xpose.msra.mxu0 0.0
      %1502 = vmatprep.subr.mxu0 0.0
      %1503 = vmatpush1.xpose.msra.mxu0 0.0
      %1504 = vmatprep.subr.mxu0 0.0
      %1505 = vmatpush1.xpose.msra.mxu0 0.0
      %1506 = vmatprep.subr.mxu0 0.0
      %1507 = vmatpush1.xpose.msra.mxu0 0.0
      %1508 = vmatprep.mubr.f32.mxu0 0.0
      %1509 = vmatmul.mubr.f32.gmra.mrb[0].mxu0 %v1440
      %v1510 = vpop.f32.mrb[0].mxu0
      %v1511 = vadd.f32 0.0, %v1510
      %v1512 = vpop.f32.mrb[0].mxu0
      %1513 = vdwg.mxu0
      %1514 = vrot.lane.b32.xlu0 %v1065, 112
      %v1515 = vpop.permute.xlu0 %1514
      %1516 = vrot.lane.b32.xlu0 %v1065, 80
      %v1517 = vpop.permute.xlu0 %1516
      %v1518 = vsel %vm1095, %v1515, 0
      %v1520 = vsel %vm1095, %v1517, 0
      %1522 = vmatprep.subr.mxu0 0.0
      %1523 = vmatpush1.xpose.msra.mxu0 %v1520
      %1524 = vmatprep.subr.mxu0 0.0
      %1525 = vmatpush1.xpose.msra.mxu0 0.0
      %1526 = vmatprep.subr.mxu0 0.0
      %1527 = vmatpush1.xpose.msra.mxu0 0.0
      %1528 = vmatprep.subr.mxu0 0.0
      %1529 = vmatpush1.xpose.msra.mxu0 0.0
      %1530 = vmatprep.subr.mxu0 0.0
      %1531 = vmatpush1.xpose.msra.mxu0 0.0
      %1532 = vmatprep.subr.mxu0 0.0
      %1533 = vmatpush1.xpose.msra.mxu0 0.0
      %1534 = vmatprep.subr.mxu0 0.0
      %1535 = vmatpush1.xpose.msra.mxu0 0.0
      %1536 = vmatprep.subr.mxu0 0.0
      %1537 = vmatpush1.xpose.msra.mxu0 0.0
      %1538 = vmatprep.subr.mxu0 0.0
      %1539 = vmatpush1.xpose.msra.mxu0 0.0
      %1540 = vmatprep.subr.mxu0 0.0
      %1541 = vmatpush1.xpose.msra.mxu0 0.0
      %1542 = vmatprep.subr.mxu0 0.0
      %1543 = vmatpush1.xpose.msra.mxu0 0.0
      %1544 = vmatprep.subr.mxu0 0.0
      %1545 = vmatpush1.xpose.msra.mxu0 0.0
      %1546 = vmatprep.subr.mxu0 0.0
      %1547 = vmatpush1.xpose.msra.mxu0 0.0
      %1548 = vmatprep.subr.mxu0 0.0
      %1549 = vmatpush1.xpose.msra.mxu0 0.0
      %1550 = vmatprep.subr.mxu0 0.0
      %1551 = vmatpush1.xpose.msra.mxu0 0.0
      %1552 = vmatprep.subr.mxu0 0.0
      %1553 = vmatpush1.xpose.msra.mxu0 0.0
      %1554 = vmatprep.subr.mxu0 0.0
      %1555 = vmatpush1.xpose.msra.mxu0 0.0
      %1556 = vmatprep.subr.mxu0 0.0
      %1557 = vmatpush1.xpose.msra.mxu0 0.0
      %1558 = vmatprep.subr.mxu0 0.0
      %1559 = vmatpush1.xpose.msra.mxu0 0.0
      %1560 = vmatprep.subr.mxu0 0.0
      %1561 = vmatpush1.xpose.msra.mxu0 0.0
      %1562 = vmatprep.subr.mxu0 0.0
      %1563 = vmatpush1.xpose.msra.mxu0 0.0
      %1564 = vmatprep.subr.mxu0 0.0
      %1565 = vmatpush1.xpose.msra.mxu0 0.0
      %1566 = vmatprep.subr.mxu0 0.0
      %1567 = vmatpush1.xpose.msra.mxu0 0.0
      %1568 = vmatprep.subr.mxu0 0.0
      %1569 = vmatpush1.xpose.msra.mxu0 0.0
      %1570 = vmatprep.subr.mxu0 0.0
      %1571 = vmatpush1.xpose.msra.mxu0 0.0
      %1572 = vmatprep.subr.mxu0 0.0
      %1573 = vmatpush1.xpose.msra.mxu0 0.0
      %1574 = vmatprep.subr.mxu0 0.0
      %1575 = vmatpush1.xpose.msra.mxu0 0.0
      %1576 = vmatprep.subr.mxu0 0.0
      %1577 = vmatpush1.xpose.msra.mxu0 0.0
      %1578 = vmatprep.subr.mxu0 0.0
      %1579 = vmatpush1.xpose.msra.mxu0 0.0
      %1580 = vmatprep.subr.mxu0 0.0
      %1581 = vmatpush1.xpose.msra.mxu0 0.0
      %1582 = vmatprep.subr.mxu0 0.0
      %1583 = vmatpush1.xpose.msra.mxu0 0.0
      %1584 = vmatprep.subr.mxu0 0.0
      %1585 = vmatpush1.xpose.msra.mxu0 0.0
      %1586 = vmatprep.mubr.f32.mxu0 0.0
      %1587 = vmatmul.mubr.f32.gmra.mrb[0].mxu0 %v1518
      %v1588 = vpop.f32.mrb[0].mxu0
      %v1589 = vadd.f32 0.0, %v1588
      %v1590 = vpop.f32.mrb[0].mxu0
      %1591 = vdwg.mxu0
      %v1592 = vmul.f32 %v1511, 0.25
      %v1593 = vmul.f32 %v1589, 0.25
      %v1594 = vadd.f32 %v1592, %v1252
      %v1595 = vadd.f32 %v1593, %v1256
      %v1596 = vsel %vm1261, %v1594, -inf
      %1597 = vmax.xlane.f32.xlu0 %v1596
      %v1598 = vpop.xlane.xlu0 %1597
      %v1599 = vsel %vm1261, %v1595, -inf
      %1600 = vmax.xlane.f32.xlu0 %v1599
      %v1601 = vpop.xlane.xlu0 %1600
      %v1602 = vsub.f32 %v1594, %v1598
      %v1603 = vsub.f32 %v1595, %v1601
      %v1604 = vmul.f32 %v1602, 1.442695
      %v1605 = vpow.pop %v1604
      %v1606 = vmul.f32 %v1603, 1.442695
      %v1607 = vpow.pop %v1606
      %v1608 = vsel %vm1261, %v1605, 0.0
      %1609 = vadd.xlane.f32.xlu0 %v1608
      %v1610 = vpop.xlane.xlu0 %1609
      %v1611 = vsel %vm1261, %v1607, 0.0
      %1612 = vadd.xlane.f32.xlu0 %v1611
      %v1613 = vpop.xlane.xlu0 %1612
      %v1614 = vrcp.pop %v1610
      %v1615 = vrcp.pop %v1613
      %v1616 = vmul.f32 %v1605, %v1614
      %v1617 = vmul.f32 %v1607, %v1615
      %1618 = vrot.lane.b32.xlu0 %v1062, 48
      %v1619 = vpop.permute.xlu0 %1618
      %v1622 = vsel %vm1261, %v1616, 0
      %1624 = vmatprep.subr.mxu0 0.0
      %1625 = vmatpush1.msra.mxu0 %v1619
      %1626 = vmatprep.subr.mxu0 0.0
      %1627 = vmatpush1.msra.mxu0 0.0
      %1628 = vmatprep.subr.mxu0 0.0
      %1629 = vmatpush1.msra.mxu0 0.0
      %1630 = vmatprep.subr.mxu0 0.0
      %1631 = vmatpush1.msra.mxu0 0.0
      %1632 = vmatprep.subr.mxu0 0.0
      %1633 = vmatpush1.msra.mxu0 0.0
      %1634 = vmatprep.subr.mxu0 0.0
      %1635 = vmatpush1.msra.mxu0 0.0
      %1636 = vmatprep.subr.mxu0 0.0
      %1637 = vmatpush1.msra.mxu0 0.0
      %1638 = vmatprep.subr.mxu0 0.0
      %1639 = vmatpush1.msra.mxu0 0.0
      %1640 = vmatprep.subr.mxu0 0.0
      %1641 = vmatpush1.msra.mxu0 0.0
      %1642 = vmatprep.subr.mxu0 0.0
      %1643 = vmatpush1.msra.mxu0 0.0
      %1644 = vmatprep.subr.mxu0 0.0
      %1645 = vmatpush1.msra.mxu0 0.0
      %1646 = vmatprep.subr.mxu0 0.0
      %1647 = vmatpush1.msra.mxu0 0.0
      %1648 = vmatprep.subr.mxu0 0.0
      %1649 = vmatpush1.msra.mxu0 0.0
      %1650 = vmatprep.subr.mxu0 0.0
      %1651 = vmatpush1.msra.mxu0 0.0
      %1652 = vmatprep.subr.mxu0 0.0
      %1653 = vmatpush1.msra.mxu0 0.0
      %1654 = vmatprep.subr.mxu0 0.0
      %1655 = vmatpush1.msra.mxu0 0.0
      %1656 = vmatprep.subr.mxu0 0.0
      %1657 = vmatpush1.msra.mxu0 0.0
      %1658 = vmatprep.subr.mxu0 0.0
      %1659 = vmatpush1.msra.mxu0 0.0
      %1660 = vmatprep.subr.mxu0 0.0
      %1661 = vmatpush1.msra.mxu0 0.0
      %1662 = vmatprep.subr.mxu0 0.0
      %1663 = vmatpush1.msra.mxu0 0.0
      %1664 = vmatprep.subr.mxu0 0.0
      %1665 = vmatpush1.msra.mxu0 0.0
      %1666 = vmatprep.subr.mxu0 0.0
      %1667 = vmatpush1.msra.mxu0 0.0
      %1668 = vmatprep.subr.mxu0 0.0
      %1669 = vmatpush1.msra.mxu0 0.0
      %1670 = vmatprep.subr.mxu0 0.0
      %1671 = vmatpush1.msra.mxu0 0.0
      %1672 = vmatprep.subr.mxu0 0.0
      %1673 = vmatpush1.msra.mxu0 0.0
      %1674 = vmatprep.subr.mxu0 0.0
      %1675 = vmatpush1.msra.mxu0 0.0
      %1676 = vmatprep.subr.mxu0 0.0
      %1677 = vmatpush1.msra.mxu0 0.0
      %1678 = vmatprep.subr.mxu0 0.0
      %1679 = vmatpush1.msra.mxu0 0.0
      %1680 = vmatprep.subr.mxu0 0.0
      %1681 = vmatpush1.msra.mxu0 0.0
      %1682 = vmatprep.subr.mxu0 0.0
      %1683 = vmatpush1.msra.mxu0 0.0
      %1684 = vmatprep.subr.mxu0 0.0
      %1685 = vmatpush1.msra.mxu0 0.0
      %1686 = vmatprep.subr.mxu0 0.0
      %1687 = vmatpush1.msra.mxu0 0.0
      %1688 = vmatprep.mubr.f32.mxu0 0.0
      %1689 = vmatmul.mubr.f32.gmra.mrb[0].mxu0 %v1622
      %v1690 = vpop.f32.mrb[0].mxu0
      %v1691 = vadd.f32 0.0, %v1690
      %v1692 = vpop.f32.mrb[0].mxu0
      %1693 = vdwg.mxu0
      %1694 = vrot.lane.b32.xlu0 %v1065, 48
      %v1695 = vpop.permute.xlu0 %1694
      %v1698 = vsel %vm1261, %v1617, 0
      %1700 = vmatprep.subr.mxu0 0.0
      %1701 = vmatpush1.msra.mxu0 %v1695
      %1702 = vmatprep.subr.mxu0 0.0
      %1703 = vmatpush1.msra.mxu0 0.0
      %1704 = vmatprep.subr.mxu0 0.0
      %1705 = vmatpush1.msra.mxu0 0.0
      %1706 = vmatprep.subr.mxu0 0.0
      %1707 = vmatpush1.msra.mxu0 0.0
      %1708 = vmatprep.subr.mxu0 0.0
      %1709 = vmatpush1.msra.mxu0 0.0
      %1710 = vmatprep.subr.mxu0 0.0
      %1711 = vmatpush1.msra.mxu0 0.0
      %1712 = vmatprep.subr.mxu0 0.0
      %1713 = vmatpush1.msra.mxu0 0.0
      %1714 = vmatprep.subr.mxu0 0.0
      %1715 = vmatpush1.msra.mxu0 0.0
      %1716 = vmatprep.subr.mxu0 0.0
      %1717 = vmatpush1.msra.mxu0 0.0
      %1718 = vmatprep.subr.mxu0 0.0
      %1719 = vmatpush1.msra.mxu0 0.0
      %1720 = vmatprep.subr.mxu0 0.0
      %1721 = vmatpush1.msra.mxu0 0.0
      %1722 = vmatprep.subr.mxu0 0.0
      %1723 = vmatpush1.msra.mxu0 0.0
      %1724 = vmatprep.subr.mxu0 0.0
      %1725 = vmatpush1.msra.mxu0 0.0
      %1726 = vmatprep.subr.mxu0 0.0
      %1727 = vmatpush1.msra.mxu0 0.0
      %1728 = vmatprep.subr.mxu0 0.0
      %1729 = vmatpush1.msra.mxu0 0.0
      %1730 = vmatprep.subr.mxu0 0.0
      %1731 = vmatpush1.msra.mxu0 0.0
      %1732 = vmatprep.subr.mxu0 0.0
      %1733 = vmatpush1.msra.mxu0 0.0
      %1734 = vmatprep.subr.mxu0 0.0
      %1735 = vmatpush1.msra.mxu0 0.0
      %1736 = vmatprep.subr.mxu0 0.0
      %1737 = vmatpush1.msra.mxu0 0.0
      %1738 = vmatprep.subr.mxu0 0.0
      %1739 = vmatpush1.msra.mxu0 0.0
      %1740 = vmatprep.subr.mxu0 0.0
      %1741 = vmatpush1.msra.mxu0 0.0
      %1742 = vmatprep.subr.mxu0 0.0
      %1743 = vmatpush1.msra.mxu0 0.0
      %1744 = vmatprep.subr.mxu0 0.0
      %1745 = vmatpush1.msra.mxu0 0.0
      %1746 = vmatprep.subr.mxu0 0.0
      %1747 = vmatpush1.msra.mxu0 0.0
      %1748 = vmatprep.subr.mxu0 0.0
      %1749 = vmatpush1.msra.mxu0 0.0
      %1750 = vmatprep.subr.mxu0 0.0
      %1751 = vmatpush1.msra.mxu0 0.0
      %1752 = vmatprep.subr.mxu0 0.0
      %1753 = vmatpush1.msra.mxu0 0.0
      %1754 = vmatprep.subr.mxu0 0.0
      %1755 = vmatpush1.msra.mxu0 0.0
      %1756 = vmatprep.subr.mxu0 0.0
      %1757 = vmatpush1.msra.mxu0 0.0
      %1758 = vmatprep.subr.mxu0 0.0
      %1759 = vmatpush1.msra.mxu0 0.0
      %1760 = vmatprep.subr.mxu0 0.0
      %1761 = vmatpush1.msra.mxu0 0.0
      %1762 = vmatprep.subr.mxu0 0.0
      %1763 = vmatpush1.msra.mxu0 0.0
      %1764 = vmatprep.mubr.f32.mxu0 0.0
      %1765 = vmatmul.mubr.f32.gmra.mrb[0].mxu0 %v1698
      %v1766 = vpop.f32.mrb[0].mxu0
      %v1767 = vadd.f32 0.0, %v1766
      %v1768 = vpop.f32.mrb[0].mxu0
      %1769 = vdwg.mxu0
      %1772 = vrot.lane.b32.xlu0 %v1691, 16
      %v1773 = vpop.permute.xlu0 %1772
      %1774 = vrot.lane.b32.xlu0 %v1767, 16
      %v1775 = vpop.permute.xlu0 %1774
      %v1778 = vsel %vm1095, %v1357, %v1773
      %v1779 = vsel %vm1095, %v1433, %v1775
      %v1780 = vpack.c.bf16 %v1779, %v1778
      %v1781 = vld [vmem:[%s865] sm:$0xf]
      %v1782 = vld [vmem:[%s865 + $0x4] sm:$0xf]
      %v1783 = vld [vmem:[%s865 + $0x8] sm:$0xf]
      %v1784 = vld [vmem:[%s865 + $0xc] sm:$0xf]
      %v1785 = vld [vmem:[%s872] sm:$0x1]
      %v1787 = vlaneseq
      %v1788 = vshrl.u32 %v1787, 7
      %v1789 = vsub.s32 0, %v1788
      %v1790 = vrot.slane %v1785, %v1789
      %v1796 = vunpack.c.l.b16 %v1781
      %v1797 = vunpack.c.l.b16 %v1782
      %v1798 = vunpack.c.l.b16 %v1783
      %v1799 = vunpack.c.l.b16 %v1784
      %v1800 = vpack.c.b16 %v1797, %v1796
      %v1801 = vpack.c.b16 %v1799, %v1798
      %v1805 = vsel %vm1023, %v1780, 0
      %1807 = vmatprep.subr.bf16.mxu0 0
      %1808 = vmatpush1.bf16.msra.mxu0 %v1800
      %1809 = vmatprep.subr.bf16.mxu0 0
      %1810 = vmatpush1.bf16.msra.mxu0 %v1801
      %1811 = vmatprep.subr.bf16.mxu0 0
      %1812 = vmatpush1.bf16.msra.mxu0 0
      %1813 = vmatprep.subr.bf16.mxu0 0
      %1814 = vmatpush1.bf16.msra.mxu0 0
      %1815 = vmatprep.subr.bf16.mxu0 0
      %1816 = vmatpush1.bf16.msra.mxu0 0
      %1817 = vmatprep.subr.bf16.mxu0 0
      %1818 = vmatpush1.bf16.msra.mxu0 0
      %1819 = vmatprep.subr.bf16.mxu0 0
      %1820 = vmatpush1.bf16.msra.mxu0 0
      %1821 = vmatprep.subr.bf16.mxu0 0
      %1822 = vmatpush1.bf16.msra.mxu0 0
      %1823 = vmatprep.subr.bf16.mxu0 0
      %1824 = vmatpush1.bf16.msra.mxu0 0
      %1825 = vmatprep.subr.bf16.mxu0 0
      %1826 = vmatpush1.bf16.msra.mxu0 0
      %1827 = vmatprep.subr.bf16.mxu0 0
      %1828 = vmatpush1.bf16.msra.mxu0 0
      %1829 = vmatprep.subr.bf16.mxu0 0
      %1830 = vmatpush1.bf16.msra.mxu0 0
      %1831 = vmatprep.subr.bf16.mxu0 0
      %1832 = vmatpush1.bf16.msra.mxu0 0
      %1833 = vmatprep.subr.bf16.mxu0 0
      %1834 = vmatpush1.bf16.msra.mxu0 0
      %1835 = vmatprep.subr.bf16.mxu0 0
      %1836 = vmatpush1.bf16.msra.mxu0 0
      %1837 = vmatprep.subr.bf16.mxu0 0
      %1838 = vmatpush1.bf16.msra.mxu0 0
      %1839 = vmatprep.mubr.bf16.mxu0 0
      %1840 = vmatmul.mubr.bf16.gmra.mrb[0].mxu0 %v1805
      %v1841 = vpop.f32.mrb[0].mxu0
      %v1842 = vadd.f32 %v1790, %v1841
      %v1843 = vpop.f32.mrb[0].mxu0
      %v1844 = vpop.f32.mrb[0].mxu0
      %v1845 = vadd.f32 %v1790, %v1844
      %v1846 = vpop.f32.mrb[0].mxu0
      %1847 = vdwg.mxu0
      %v1848 = vadd.f32 %v997, %v1842
      %v1849 = vadd.f32 %v998, %v1845
      %v1850 = vld [vmem:[%s879] sm:$0x1]
      %v1851 = vld [vmem:[%s886] sm:$0x1]
      %v1852 = vsel %vm1023, %v1848, 0.0
      %1853 = vadd.xlane.f32.xlu0 %v1852
      %v1854 = vpop.xlane.xlu0 %1853
      %v1855 = vsel %vm1023, %v1849, 0.0
      %1856 = vadd.xlane.f32.xlu0 %v1855
      %v1857 = vpop.xlane.xlu0 %1856
      %v1858 = vrcp.pop 32.0
      %v1859 = vmul.f32 %v1854, %v1858
      %v1860 = vmul.f32 %v1857, %v1858
      %v1861 = vsub.f32 %v1848, %v1859
      %v1862 = vsub.f32 %v1849, %v1860
      %v1863 = vmul.f32 %v1861, %v1861
      %v1864 = vmul.f32 %v1862, %v1862
      %v1865 = vsel %vm1023, %v1863, 0.0
      %1866 = vadd.xlane.f32.xlu0 %v1865
      %v1867 = vpop.xlane.xlu0 %1866
      %v1868 = vsel %vm1023, %v1864, 0.0
      %1869 = vadd.xlane.f32.xlu0 %v1868
      %v1870 = vpop.xlane.xlu0 %1869
      %v1871 = vmul.f32 %v1867, %v1858
      %v1872 = vmul.f32 %v1870, %v1858
      %v1873 = vadd.f32 %v1871, 1e-12
      %v1874 = vadd.f32 %v1872, 1e-12
      %v1875 = vrsqrt.pop %v1873
      %v1876 = vrsqrt.pop %v1874
      %v1877 = vmul.f32 %v1861, %v1875
      %v1878 = vmul.f32 %v1862, %v1876
      %v1880 = vlaneseq
      %v1881 = vshrl.u32 %v1880, 7
      %v1882 = vsub.s32 0, %v1881
      %v1883 = vrot.slane %v1850, %v1882
      %v1885 = vmul.f32 %v1877, %v1883
      %v1886 = vmul.f32 %v1878, %v1883
      %v1888 = vlaneseq
      %v1889 = vshrl.u32 %v1888, 7
      %v1890 = vsub.s32 0, %v1889
      %v1891 = vrot.slane %v1851, %v1890
      %v1893 = vadd.f32 %v1885, %v1891
      %v1894 = vadd.f32 %v1886, %v1891
      %v1895 = vpack.c.bf16 %v1894, %v1893
      %v1896 = vld [vmem:[%s895] sm:$0xf]
      %v1897 = vld [vmem:[%s895 + $0x4] sm:$0xf]
      %v1898 = vld [vmem:[%s895 + $0x8] sm:$0xf]
      %v1899 = vld [vmem:[%s895 + $0xc] sm:$0xf]
      %v1900 = vld [vmem:[%s902] sm:$0x1]
      %v1902 = vlaneseq
      %v1903 = vshrl.u32 %v1902, 7
      %v1904 = vsub.s32 0, %v1903
      %v1905 = vrot.slane %v1900, %v1904
      %v1911 = vunpack.c.l.b16 %v1896
      %v1912 = vunpack.c.l.b16 %v1897
      %v1913 = vunpack.c.l.b16 %v1898
      %v1914 = vunpack.c.l.b16 %v1899
      %v1915 = vpack.c.b16 %v1912, %v1911
      %v1916 = vpack.c.b16 %v1914, %v1913
      %v1920 = vsel %vm1023, %v1895, 0
      %1922 = vmatprep.subr.bf16.mxu0 0
      %1923 = vmatpush1.bf16.msra.mxu0 %v1915
      %1924 = vmatprep.subr.bf16.mxu0 0
      %1925 = vmatpush1.bf16.msra.mxu0 %v1916
      %1926 = vmatprep.subr.bf16.mxu0 0
      %1927 = vmatpush1.bf16.msra.mxu0 0
      %1928 = vmatprep.subr.bf16.mxu0 0
      %1929 = vmatpush1.bf16.msra.mxu0 0
      %1930 = vmatprep.subr.bf16.mxu0 0
      %1931 = vmatpush1.bf16.msra.mxu0 0
      %1932 = vmatprep.subr.bf16.mxu0 0
      %1933 = vmatpush1.bf16.msra.mxu0 0
      %1934 = vmatprep.subr.bf16.mxu0 0
      %1935 = vmatpush1.bf16.msra.mxu0 0
      %1936 = vmatprep.subr.bf16.mxu0 0
      %1937 = vmatpush1.bf16.msra.mxu0 0
      %1938 = vmatprep.subr.bf16.mxu0 0
      %1939 = vmatpush1.bf16.msra.mxu0 0
      %1940 = vmatprep.subr.bf16.mxu0 0
      %1941 = vmatpush1.bf16.msra.mxu0 0
      %1942 = vmatprep.subr.bf16.mxu0 0
      %1943 = vmatpush1.bf16.msra.mxu0 0
      %1944 = vmatprep.subr.bf16.mxu0 0
      %1945 = vmatpush1.bf16.msra.mxu0 0
      %1946 = vmatprep.subr.bf16.mxu0 0
      %1947 = vmatpush1.bf16.msra.mxu0 0
      %1948 = vmatprep.subr.bf16.mxu0 0
      %1949 = vmatpush1.bf16.msra.mxu0 0
      %1950 = vmatprep.subr.bf16.mxu0 0
      %1951 = vmatpush1.bf16.msra.mxu0 0
      %1952 = vmatprep.subr.bf16.mxu0 0
      %1953 = vmatpush1.bf16.msra.mxu0 0
      %1954 = vmatprep.mubr.bf16.mxu0 0
      %1955 = vmatmul.mubr.bf16.gmra.mrb[0].mxu0 %v1920
      %v1956 = vpop.f32.mrb[0].mxu0
      %v1957 = vadd.f32 %v1905, %v1956
      %v1958 = vpop.f32.mrb[0].mxu0
      %v1959 = vpop.f32.mrb[0].mxu0
      %v1960 = vadd.f32 %v1905, %v1959
      %v1961 = vpop.f32.mrb[0].mxu0
      %1962 = vdwg.mxu0
      %v1963 = vmul.f32 %v1957, 0.5
      %v1964 = vmul.f32 %v1960, 0.5
      %v1965 = vmul.f32 %v1957, 0.044715
      %v1966 = vmul.f32 %v1960, 0.044715
      %v1967 = vmul.f32 %v1965, %v1957
      %v1968 = vmul.f32 %v1966, %v1960
      %v1969 = vmul.f32 %v1967, %v1957
      %v1970 = vmul.f32 %v1968, %v1960
      %v1971 = vadd.f32 %v1957, %v1969
      %v1972 = vadd.f32 %v1960, %v1970
      %v1973 = vmul.f32 %v1971, 0.7978846
      %v1974 = vmul.f32 %v1972, 0.7978846
      %v1975 = vtanh.pop %v1973
      %v1976 = vtanh.pop %v1974
      %v1977 = vadd.f32 %v1975, 1.0
      %v1978 = vadd.f32 %v1976, 1.0
      %v1979 = vmul.f32 %v1963, %v1977
      %v1980 = vmul.f32 %v1964, %v1978
      %v1981 = vpack.c.bf16 %v1980, %v1979
      %v1982 = vld [vmem:[%s911] sm:$0xf]
      %v1983 = vld [vmem:[%s911 + $0x4] sm:$0xf]
      %v1984 = vld [vmem:[%s911 + $0x8] sm:$0xf]
      %v1985 = vld [vmem:[%s911 + $0xc] sm:$0xf]
      %v1986 = vld [vmem:[%s911 + $0x10] sm:$0xf]
      %v1987 = vld [vmem:[%s911 + $0x14] sm:$0xf]
      %v1988 = vld [vmem:[%s911 + $0x18] sm:$0xf]
      %v1989 = vld [vmem:[%s911 + $0x1c] sm:$0xf]
      %v1990 = vld [vmem:[%s918] sm:$0x1]
      %v1992 = vlaneseq
      %v1993 = vshrl.u32 %v1992, 7
      %v1994 = vsub.s32 0, %v1993
      %v1995 = vrot.slane %v1990, %v1994
      %v2005 = vunpack.c.l.b16 %v1982
      %v2006 = vunpack.c.l.b16 %v1983
      %v2007 = vunpack.c.l.b16 %v1984
      %v2008 = vunpack.c.l.b16 %v1985
      %v2009 = vunpack.c.l.b16 %v1986
      %v2010 = vunpack.c.l.b16 %v1987
      %v2011 = vunpack.c.l.b16 %v1988
      %v2012 = vunpack.c.l.b16 %v1989
      %v2013 = vpack.c.b16 %v2006, %v2005
      %v2014 = vpack.c.b16 %v2008, %v2007
      %v2015 = vpack.c.b16 %v2010, %v2009
      %v2016 = vpack.c.b16 %v2012, %v2011
      %vm2021 = vcmask 523264
      %v2023 = vsel %vm2021, %v1981, 0
      %2025 = vmatprep.subr.bf16.mxu0 0
      %2026 = vmatpush1.bf16.msra.mxu0 %v2013
      %2027 = vmatprep.subr.bf16.mxu0 0
      %2028 = vmatpush1.bf16.msra.mxu0 %v2014
      %2029 = vmatprep.subr.bf16.mxu0 0
      %2030 = vmatpush1.bf16.msra.mxu0 %v2015
      %2031 = vmatprep.subr.bf16.mxu0 0
      %2032 = vmatpush1.bf16.msra.mxu0 %v2016
      %2033 = vmatprep.subr.bf16.mxu0 0
      %2034 = vmatpush1.bf16.msra.mxu0 0
      %2035 = vmatprep.subr.bf16.mxu0 0
      %2036 = vmatpush1.bf16.msra.mxu0 0
      %2037 = vmatprep.subr.bf16.mxu0 0
      %2038 = vmatpush1.bf16.msra.mxu0 0
      %2039 = vmatprep.subr.bf16.mxu0 0
      %2040 = vmatpush1.bf16.msra.mxu0 0
      %2041 = vmatprep.subr.bf16.mxu0 0
      %2042 = vmatpush1.bf16.msra.mxu0 0
      %2043 = vmatprep.subr.bf16.mxu0 0
      %2044 = vmatpush1.bf16.msra.mxu0 0
      %2045 = vmatprep.subr.bf16.mxu0 0
      %2046 = vmatpush1.bf16.msra.mxu0 0
      %2047 = vmatprep.subr.bf16.mxu0 0
      %2048 = vmatpush1.bf16.msra.mxu0 0
      %2049 = vmatprep.subr.bf16.mxu0 0
      %2050 = vmatpush1.bf16.msra.mxu0 0
      %2051 = vmatprep.subr.bf16.mxu0 0
      %2052 = vmatpush1.bf16.msra.mxu0 0
      %2053 = vmatprep.subr.bf16.mxu0 0
      %2054 = vmatpush1.bf16.msra.mxu0 0
      %2055 = vmatprep.subr.bf16.mxu0 0
      %2056 = vmatpush1.bf16.msra.mxu0 0
      %2057 = vmatprep.mubr.bf16.mxu0 0
      %2058 = vmatmul.mubr.bf16.gmra.mrb[0].mxu0 %v2023
      %v2059 = vpop.f32.mrb[0].mxu0
      %v2060 = vadd.f32 %v1995, %v2059
      %v2061 = vpop.f32.mrb[0].mxu0
      %v2062 = vpop.f32.mrb[0].mxu0
      %v2063 = vadd.f32 %v1995, %v2062
      %v2064 = vpop.f32.mrb[0].mxu0
      %2065 = vdwg.mxu0
      %v2066 = vadd.f32 %v1893, %v2060
      %v2067 = vadd.f32 %v1894, %v2063
      %v2068 = vld [vmem:[%s925] sm:$0x1]
      %v2069 = vld [vmem:[%s932] sm:$0x1]
      %v2070 = vsel %vm1023, %v2066, 0.0
      %2071 = vadd.xlane.f32.xlu0 %v2070
      %v2072 = vpop.xlane.xlu0 %2071
      %v2073 = vsel %vm1023, %v2067, 0.0
      %2074 = vadd.xlane.f32.xlu0 %v2073
      %v2075 = vpop.xlane.xlu0 %2074
      %v2076 = vmul.f32 %v2072, %v1858
      %v2077 = vmul.f32 %v2075, %v1858
      %v2078 = vsub.f32 %v2066, %v2076
      %v2079 = vsub.f32 %v2067, %v2077
      %v2080 = vmul.f32 %v2078, %v2078
      %v2081 = vmul.f32 %v2079, %v2079
      %v2082 = vsel %vm1023, %v2080, 0.0
      %2083 = vadd.xlane.f32.xlu0 %v2082
      %v2084 = vpop.xlane.xlu0 %2083
      %v2085 = vsel %vm1023, %v2081, 0.0
      %2086 = vadd.xlane.f32.xlu0 %v2085
      %v2087 = vpop.xlane.xlu0 %2086
      %v2088 = vmul.f32 %v2084, %v1858
      %v2089 = vmul.f32 %v2087, %v1858
      %v2090 = vadd.f32 %v2088, 1e-12
      %v2091 = vadd.f32 %v2089, 1e-12
      %v2092 = vrsqrt.pop %v2090
      %v2093 = vrsqrt.pop %v2091
      %v2094 = vmul.f32 %v2078, %v2092
      %v2095 = vmul.f32 %v2079, %v2093
      %v2097 = vlaneseq
      %v2098 = vshrl.u32 %v2097, 7
      %v2099 = vsub.s32 0, %v2098
      %v2100 = vrot.slane %v2068, %v2099
      %v2102 = vmul.f32 %v2094, %v2100
      %v2103 = vmul.f32 %v2095, %v2100
      %v2105 = vlaneseq
      %v2106 = vshrl.u32 %v2105, 7
      %v2107 = vsub.s32 0, %v2106
      %v2108 = vrot.slane %v2069, %v2107
      %v2110 = vadd.f32 %v2102, %v2108
      %v2111 = vadd.f32 %v2103, %v2108
      %2112 = vst.msk [vmem:[#allocation2] sm:$0xff] %vm1023, %v2110
      %2113 = vst.msk [vmem:[#allocation2 + $0x8] sm:$0xff] %vm1023, %v2111
      %p2114 = scmp.eq.s32.totalorder %s32, 1
      // Predicated region
      $region89: #{dpr_combined_forward.1} parent=83 // pred_check
        %p2115 = pneg %p2114
      $region90: #{dpr_combined_forward.1} parent=83 // pred_check_branch
        %2117 = sbr.rel (%p2115) target = $region92
      $region91: #{dpr_combined_forward.1} parent=83 // pred_region
        %v2118 = vlaneseq
        %v2119 = vand.u32 %v2118, 127
        %v2120 = vlaneseq
        %v2121 = vshrl.u32 %v2120, 7
        %v2122 = vmul.u32 %v2121, 8
        %vm2123 = vcmp.eq.s32.totalorder %v2119, %v2122
        %v2124 = vsel %vm2123, 1, 0
        %v2125 = vcvt.s32.f32 %v2124
        %v2127 = vsel %vm1095, %v2125, 0
        %2129 = vmatprep.subr.mxu0 0.0
        %2130 = vmatpush1.msra.mxu0 %v2110
        %2131 = vmatprep.subr.mxu0 0.0
        %2132 = vmatpush1.msra.mxu0 %v2111
        %2133 = vmatprep.subr.mxu0 0.0
        %2134 = vmatpush1.msra.mxu0 0.0
        %2135 = vmatprep.subr.mxu0 0.0
        %2136 = vmatpush1.msra.mxu0 0.0
        %2137 = vmatprep.subr.mxu0 0.0
        %2138 = vmatpush1.msra.mxu0 0.0
        %2139 = vmatprep.subr.mxu0 0.0
        %2140 = vmatpush1.msra.mxu0 0.0
        %2141 = vmatprep.subr.mxu0 0.0
        %2142 = vmatpush1.msra.mxu0 0.0
        %2143 = vmatprep.subr.mxu0 0.0
        %2144 = vmatpush1.msra.mxu0 0.0
        %2145 = vmatprep.subr.mxu0 0.0
        %2146 = vmatpush1.msra.mxu0 0.0
        %2147 = vmatprep.subr.mxu0 0.0
        %2148 = vmatpush1.msra.mxu0 0.0
        %2149 = vmatprep.subr.mxu0 0.0
        %2150 = vmatpush1.msra.mxu0 0.0
        %2151 = vmatprep.subr.mxu0 0.0
        %2152 = vmatpush1.msra.mxu0 0.0
        %2153 = vmatprep.subr.mxu0 0.0
        %2154 = vmatpush1.msra.mxu0 0.0
        %2155 = vmatprep.subr.mxu0 0.0
        %2156 = vmatpush1.msra.mxu0 0.0
        %2157 = vmatprep.subr.mxu0 0.0
        %2158 = vmatpush1.msra.mxu0 0.0
        %2159 = vmatprep.subr.mxu0 0.0
        %2160 = vmatpush1.msra.mxu0 0.0
        %2161 = vmatprep.subr.mxu0 0.0
        %2162 = vmatpush1.msra.mxu0 0.0
        %2163 = vmatprep.subr.mxu0 0.0
        %2164 = vmatpush1.msra.mxu0 0.0
        %2165 = vmatprep.subr.mxu0 0.0
        %2166 = vmatpush1.msra.mxu0 0.0
        %2167 = vmatprep.subr.mxu0 0.0
        %2168 = vmatpush1.msra.mxu0 0.0
        %2169 = vmatprep.subr.mxu0 0.0
        %2170 = vmatpush1.msra.mxu0 0.0
        %2171 = vmatprep.subr.mxu0 0.0
        %2172 = vmatpush1.msra.mxu0 0.0
        %2173 = vmatprep.subr.mxu0 0.0
        %2174 = vmatpush1.msra.mxu0 0.0
        %2175 = vmatprep.subr.mxu0 0.0
        %2176 = vmatpush1.msra.mxu0 0.0
        %2177 = vmatprep.subr.mxu0 0.0
        %2178 = vmatpush1.msra.mxu0 0.0
        %2179 = vmatprep.subr.mxu0 0.0
        %2180 = vmatpush1.msra.mxu0 0.0
        %2181 = vmatprep.subr.mxu0 0.0
        %2182 = vmatpush1.msra.mxu0 0.0
        %2183 = vmatprep.subr.mxu0 0.0
        %2184 = vmatpush1.msra.mxu0 0.0
        %2185 = vmatprep.subr.mxu0 0.0
        %2186 = vmatpush1.msra.mxu0 0.0
        %2187 = vmatprep.subr.mxu0 0.0
        %2188 = vmatpush1.msra.mxu0 0.0
        %2189 = vmatprep.subr.mxu0 0.0
        %2190 = vmatpush1.msra.mxu0 0.0
        %2191 = vmatprep.subr.mxu0 0.0
        %2192 = vmatpush1.msra.mxu0 0.0
        %2193 = vmatprep.mubr.f32.mxu0 0.0
        %2194 = vmatmul.mubr.f32.gmra.mrb[0].mxu0 %v2127
        %v2195 = vpop.f32.mrb[0].mxu0
        %v2196 = vadd.f32 0.0, %v2195
        %v2197 = vpop.f32.mrb[0].mxu0
        %2198 = vdwg.mxu0
        %vm2199 = vcmask 254976
        %2200 = vst.msk [vmem:[%s936] sm:$0x3] %vm2199, %v2196
      $region92: #{dpr_combined_forward.1} parent=83 // pred_fallthru
        _
      %p2201 = scmp.lt.s32.totalorder %s31, 1
      %s2202 = scalar_select %p2201, %s31, 1
      %s2203 = smul.addr %s2202, 2
      %s2204 = scalar_lea.vmem %s16, %s2203
      // Predicated region
      $region93: #{dpr_combined_forward.1} parent=83 // pred_check
        %p2205 = pneg %p497
      $region94: #{dpr_combined_forward.1} parent=83 // pred_check_branch
        %2207 = sbr.rel (%p2205) target = $region96
      $region95: #{dpr_combined_forward.1} parent=83 // pred_region
        _
      $region96: #{dpr_combined_forward.1} parent=83 // pred_fallthru
        _
    $region84: #{dpr_combined_forward.1} parent=5 // pred_fallthru
      _
    %p2208 = scmp.le.s32.totalorder 2, %s22
    // Predicated region
    $region97: #{dpr_combined_forward.1} parent=5 // pred_check
      %p2209 = pneg %p2208
    $region98: #{dpr_combined_forward.1} parent=5 // pred_check_branch
      %2211 = sbr.rel (%p2209) target = $region100
    $region99: #{dpr_combined_forward.1} parent=5 // pred_region
      %s2212 = ssub.s32 %s22, 2
      // Predicated region
      $region101: #{dpr_combined_forward.1} parent=99 // pred_check
        %p2213 = pneg %p503
      $region102: #{dpr_combined_forward.1} parent=99 // pred_check_branch
        %2215 = sbr.rel (%p2213) target = $region104
      $region103: #{dpr_combined_forward.1} parent=99 // pred_region
        %p2216 = scmp.lt.s32.totalorder %s33, 1
        %s2217 = scalar_select %p2216, %s33, 1
        %s2218 = smul.addr %s2217, 2
        %s2219 = scalar_lea.vmem %s16, %s2218
      $region104: #{dpr_combined_forward.1} parent=99 // pred_fallthru
        _
    $region100: #{dpr_combined_forward.1} parent=5 // pred_fallthru
      _
  $region6: #{dpr_combined_forward.1} parent=0 // loop_footer
    %s26 = sadd.s32 1, %s22
  $region7: #{dpr_combined_forward.1} parent=0 // loop_footer_branch
    %21 = sbr.rel target = $region3
  $region8: #{dpr_combined_forward.1} parent=0 // loop_exit
    _

</llo_original>
